<compile_context>
chip_gen: v6e
topology: v6e:2x2x1
jax: 0.10.0
libtpu: 0.0.40
codegen_flags: <defaults>
</compile_context>

<pallas_src>
import jax
import jax.numpy as jnp
from jax.experimental import pallas as pl
from jax.experimental.pallas import tpu as pltpu

H = 128            # padded hidden width (lane-dense)
OUT_W = 8          # narrow discriminator output width (lane 0 = score)
MAX_TILE_B = 2048  # batch tile upper bound (per grid step, double-buffered)


def _round_up(n, m):
    return ((n + m - 1) // m) * m


# -----------------------------------------------------------------------------
# Kernel
# -----------------------------------------------------------------------------
def bigan_kernel(x_ref, z_ref,
                 gw1, gb1, gw2, gb2, gw3, gb3, gw4, gb4,
                 ew1, eb1, ew2, eb2, ew3, eb3, ew4, eb4,
                 dw1x, dw1z, db1, dw2, db2, dw3, db3, dw4, db4,
                 real_ref, fake_ref):
    """One batch tile: Generator + Encoder + (real,fake)-batched Discriminator."""
    cdt = gw1.dtype               # MXU operand dtype (f32 or bf16)
    tb = x_ref.shape[0]

    def lin(a, w_ref, b_ref, relu=True):
        h = jnp.dot(a, w_ref[...], preferred_element_type=jnp.float32)
        h = h + b_ref[...].astype(jnp.float32)       # f32 bias on the f32 accum
        if relu:
            h = jnp.maximum(h, 0.0)
        return h.astype(cdt)

    x = x_ref[...].astype(cdt)    # (tb, input_dim)  -- lanes not padded
    z = z_ref[...].astype(cdt)    # (tb, latent_dim)

    # Generator(z): latent -> 8 -> 16 -> 20 -> input_dim (hidden dims padded to 128).
    g = lin(z, gw1, gb1)
    g = lin(g, gw2, gb2)
    g = lin(g, gw3, gb3)
    gen = lin(g, gw4, gb4, relu=False)    # (tb, input_dim), exact

    # Encoder(x): input -> 20 -> 16 -> 8 -> latent.
    e = lin(x, ew1, eb1)
    e = lin(e, ew2, eb2)
    e = lin(e, ew3, eb3)
    enc = lin(e, ew4, eb4, relu=False)    # (tb, latent_dim), exact

    # Discriminator(cat([data, code])) for (real, fake) batched along the
    # sublane axis: one 2*tb-row pass instead of two tb-row passes.  The lane
    # concat is folded into a split first-layer weight (data @ W_x + code @ W_z).
    data = jnp.concatenate([x, gen], axis=0)    # (2*tb, input_dim)
    code = jnp.concatenate([enc, z], axis=0)    # (2*tb, latent_dim)

    h = jnp.dot(data, dw1x[...], preferred_element_type=jnp.float32)
    h = h + jnp.dot(code, dw1z[...], preferred_element_type=jnp.float32)
    h = jnp.maximum(h + db1[...].astype(jnp.float32), 0.0).astype(cdt)
    h = lin(h, dw2, db2)
    h = lin(h, dw3, db3)
    logits = jnp.dot(h, dw4[...], preferred_element_type=jnp.float32)
    logits = logits + db4[...].astype(jnp.float32)          # (2*tb, OUT_W)
    sig = 1.0 / (1.0 + jnp.exp(-logits))                    # sigmoid, lane 0 valid

    real_ref[...] = sig[:tb].astype(real_ref.dtype)
    fake_ref[...] = sig[tb:].astype(fake_ref.dtype)


# -----------------------------------------------------------------------------
# One-time parameter preparation (pad / split / cast) -- cached outside the step
# -----------------------------------------------------------------------------
def _pad2(a, rows, cols, dtype):
    r, c = a.shape
    return jnp.pad(a, ((0, rows - r), (0, cols - c))).astype(dtype)


def prepare_bigan_params(params, input_dim, latent_dim, compute_dtype=jnp.float32):
    """Pad hidden dims to 128 lanes, keep true first-layer K / last-layer N,
    split the discriminator's first-layer weight, cast weights to compute_dtype.
    Zero padding is exact: padded weight rows/cols and biases are 0, ReLU(0)=0."""
    assert input_dim <= H and latent_dim <= H
    # TODO(synk): input_dim/latent_dim > 128 would need a K-tiled first layer.

    def mlp(layers, in_dim, out_dim):
        out = []
        for li, (w, b) in enumerate(layers):
            rows = in_dim if li == 0 else H
            cols = out_dim if li == len(layers) - 1 else H
            out.append((_pad2(w, rows, cols, compute_dtype),
                        _pad2(b, 1, cols, jnp.float32)))
        return out

    gen = mlp(params["gen"], latent_dim, input_dim)
    enc = mlp(params["enc"], input_dim, latent_dim)

    (dw1, db1), (dw2, db2), (dw3, db3), (dw4, db4) = params["disc"]
    disc_w = [_pad2(dw1[:input_dim], input_dim, H, compute_dtype),    # data rows
              _pad2(dw1[input_dim:], latent_dim, H, compute_dtype),   # code rows
              _pad2(dw2, H, H, compute_dtype),
              _pad2(dw3, H, H, compute_dtype),
              _pad2(dw4, H, OUT_W, compute_dtype)]
    disc_b = [_pad2(db1, 1, H, jnp.float32),
              _pad2(db2, 1, H, jnp.float32),
              _pad2(db3, 1, H, jnp.float32),
              _pad2(db4, 1, OUT_W, jnp.float32)]
    return {"gen": gen, "enc": enc, "disc_w": disc_w, "disc_b": disc_b}


def _flatten_prepared(p):
    flat = []
    for w, b in p["gen"]:
        flat += [w, b]
    for w, b in p["enc"]:
        flat += [w, b]
    dw, db = p["disc_w"], p["disc_b"]
    flat += [dw[0], dw[1], db[0], dw[2], db[1], dw[3], db[2], dw[4], db[3]]
    return flat


def _choose_tile(batch):
    b8 = _round_up(max(batch, 1), 8)
    if b8 <= 8:
        return 8, 8
    # Aim for >= 2 grid steps so both v7x TensorCores get work on the
    # "parallel" batch axis; single-TC chips just see a short sequential grid.
    tile = min(MAX_TILE_B, _round_up(pl.cdiv(b8, 2), 8))
    return tile, _round_up(b8, tile)


# -----------------------------------------------------------------------------
# Wrapper
# -----------------------------------------------------------------------------
@jax.jit
def bigan_forward(x, z, prepared):
    """x: [B, input_dim], z: [B, latent_dim] -> (disc_real [B,1], disc_fake [B,1])."""
    B, input_dim = x.shape
    latent_dim = z.shape[1]
    compute_dtype = prepared["gen"][0][0].dtype

    tile_b, B_pad = _choose_tile(B)
    grid = (B_pad // tile_b,)

    # Row-pad only (no lane padding): first-layer dots run with K = true width.
    x_p = jnp.pad(x, ((0, B_pad - B), (0, 0))).astype(compute_dtype)
    z_p = jnp.pad(z, ((0, B_pad - B), (0, 0))).astype(compute_dtype)

    flat = _flatten_prepared(prepared)

    x_spec = pl.BlockSpec((tile_b, input_dim), lambda i: (i, 0))
    z_spec = pl.BlockSpec((tile_b, latent_dim), lambda i: (i, 0))
    out_spec = pl.BlockSpec((tile_b, OUT_W), lambda i: (i, 0))
    # Constant blocks (index_map == (0, 0)) stay VMEM-resident across the grid.
    # Note: pipeline_mode=pl.Buffered(1) would free ~0.6 MiB of double-buffer
    # VMEM; left at the default for maximum toolchain compatibility.
    param_specs = [pl.BlockSpec(a.shape, lambda i: (0, 0)) for a in flat]

    # Advisory cost estimate for the XLA scheduler.
    flops = 0
    for w, _ in prepared["gen"] + prepared["enc"]:
        flops += 2 * B_pad * w.shape[0] * w.shape[1]
    for w in prepared["disc_w"]:
        flops += 2 * (2 * B_pad) * w.shape[0] * w.shape[1]
    bytes_accessed = int(
        x_p.size * x_p.dtype.itemsize + z_p.size * z_p.dtype.itemsize
        + 2 * B_pad * OUT_W * 4
        + sum(int(a.size) * a.dtype.itemsize for a in flat))
    cost = pl.CostEstimate(flops=int(flops),
                           transcendentals=int(2 * B_pad * OUT_W),
                           bytes_accessed=bytes_accessed)

    real_p, fake_p = pl.pallas_call(
        bigan_kernel,
        out_shape=(jax.ShapeDtypeStruct((B_pad, OUT_W), jnp.float32),
                   jax.ShapeDtypeStruct((B_pad, OUT_W), jnp.float32)),
        grid=grid,
        in_specs=[x_spec, z_spec] + param_specs,
        out_specs=(out_spec, out_spec),
        compiler_params=pltpu.CompilerParams(
            dimension_semantics=("parallel",),
            vmem_limit_bytes=32 * 1024 * 1024),
        cost_estimate=cost,
    )(x_p, z_p, *flat)

    return real_p[:B, :1], fake_p[:B, :1]


# -----------------------------------------------------------------------------
# Init + plain-JAX reference
# -----------------------------------------------------------------------------
def _init_linear(key, fan_in, fan_out, dtype=jnp.float32):
    """PyTorch nn.Linear default init: U(-k, k), k = 1/sqrt(fan_in)."""
    kw, kb = jax.random.split(key)
    bound = 1.0 / (fan_in ** 0.5)
    w = jax.random.uniform(kw, (fan_in, fan_out), dtype, -bound, bound)
    b = jax.random.uniform(kb, (1, fan_out), dtype, -bound, bound)
    return w, b


def init_bigan_params(key, input_dim, latent_dim, dtype=jnp.float32):
    specs = {
        "gen":  [(latent_dim, 8), (8, 16), (16, 20), (20, input_dim)],
        "enc":  [(input_dim, 20), (20, 16), (16, 8), (8, latent_dim)],
        "disc": [(input_dim + latent_dim, 20), (20, 16), (16, 8), (8, 1)],
    }
    n = sum(len(v) for v in specs.values())
    keys = iter(jax.random.split(key, n))
    return {name: [_init_linear(next(keys), fi, fo, dtype) for (fi, fo) in layers]
            for name, layers in specs.items()}


def ref_bigan_forward(x, z, params):
    """Plain-JAX reference (same math as the PyTorch forward)."""
    def mlp(a, layers, n_relu):
        for i, (w, b) in enumerate(layers):
            a = a @ w + b
            if i < n_relu:
                a = jnp.maximum(a, 0.0)
        return a

    gen = mlp(z, params["gen"], 3)
    enc = mlp(x, params["enc"], 3)

    def disc(inp):
        logits = mlp(inp, params["disc"], 3)
        return 1.0 / (1.0 + jnp.exp(-logits))

    real = disc(jnp.concatenate([x, enc], axis=1))
    fake = disc(jnp.concatenate([gen, z], axis=1))
    return real, fake


if __name__ == "__main__":
    input_dim = 64
    latent_dim = 32
    batch = 8

    key = jax.random.PRNGKey(0)
    kx, kz, kp = jax.random.split(key, 3)
    x = jax.random.normal(kx, (batch, input_dim), jnp.float32)
    z = jax.random.normal(kz, (batch, latent_dim), jnp.float32)
    params = init_bigan_params(kp, input_dim, latent_dim)

    ref_real, ref_fake = ref_bigan_forward(x, z, params)

    # --- f32 validation build (tight tolerance) ---
    prep_f32 = prepare_bigan_params(params, input_dim, latent_dim, jnp.float32)
    real32, fake32 = jax.block_until_ready(bigan_forward(x, z, prep_f32))
    assert real32.shape == (batch, 1) and fake32.shape == (batch, 1)
    assert jnp.allclose(real32, ref_real, atol=1e-5, rtol=1e-5)
    assert jnp.allclose(fake32, ref_fake, atol=1e-5, rtol=1e-5)

    # --- bf16 MXU-operand build (perf path, f32 accumulation, looser tolerance) ---
    prep_bf16 = prepare_bigan_params(params, input_dim, latent_dim, jnp.bfloat16)
    real16, fake16 = jax.block_until_ready(bigan_forward(x, z, prep_bf16))
    assert jnp.allclose(real16, ref_real, atol=5e-2, rtol=0.0)
    assert jnp.allclose(fake16, ref_fake, atol=5e-2, rtol=0.0)

    print("KERNEL_OK")
</pallas_src>

<mosaic_0001>
module attributes {stable_mosaic.version = 11 : i64} {
  func.func @bigan_kernel(%arg0: i32, %arg1: memref<8x64xf32, #tpu.memory_space<vmem>>, %arg2: memref<8x32xf32, #tpu.memory_space<vmem>>, %arg3: memref<32x128xf32, #tpu.memory_space<vmem>>, %arg4: memref<1x128xf32, #tpu.memory_space<vmem>>, %arg5: memref<128x128xf32, #tpu.memory_space<vmem>>, %arg6: memref<1x128xf32, #tpu.memory_space<vmem>>, %arg7: memref<128x128xf32, #tpu.memory_space<vmem>>, %arg8: memref<1x128xf32, #tpu.memory_space<vmem>>, %arg9: memref<128x64xf32, #tpu.memory_space<vmem>>, %arg10: memref<1x64xf32, #tpu.memory_space<vmem>>, %arg11: memref<64x128xf32, #tpu.memory_space<vmem>>, %arg12: memref<1x128xf32, #tpu.memory_space<vmem>>, %arg13: memref<128x128xf32, #tpu.memory_space<vmem>>, %arg14: memref<1x128xf32, #tpu.memory_space<vmem>>, %arg15: memref<128x128xf32, #tpu.memory_space<vmem>>, %arg16: memref<1x128xf32, #tpu.memory_space<vmem>>, %arg17: memref<128x32xf32, #tpu.memory_space<vmem>>, %arg18: memref<1x32xf32, #tpu.memory_space<vmem>>, %arg19: memref<64x128xf32, #tpu.memory_space<vmem>>, %arg20: memref<32x128xf32, #tpu.memory_space<vmem>>, %arg21: memref<1x128xf32, #tpu.memory_space<vmem>>, %arg22: memref<128x128xf32, #tpu.memory_space<vmem>>, %arg23: memref<1x128xf32, #tpu.memory_space<vmem>>, %arg24: memref<128x128xf32, #tpu.memory_space<vmem>>, %arg25: memref<1x128xf32, #tpu.memory_space<vmem>>, %arg26: memref<128x8xf32, #tpu.memory_space<vmem>>, %arg27: memref<1x8xf32, #tpu.memory_space<vmem>>, %arg28: memref<8x8xf32, #tpu.memory_space<vmem>>, %arg29: memref<8x8xf32, #tpu.memory_space<vmem>>) attributes {dimension_semantics = [#tpu.dimension_semantics<parallel>], iteration_bounds = array<i64: 1>, scalar_prefetch = 0 : i64, scratch_operands = 0 : i64, tpu.core_type = #tpu.core_type<tc>, window_params = [{transform_indices = @transform_0, window_bounds = array<i64: 8, 64>}, {transform_indices = @transform_1, window_bounds = array<i64: 8, 32>}, {pipeline_mode = #tpu.pipeline_mode<synchronous>, transform_indices = @transform_2, window_bounds = array<i64: 32, 128>}, {pipeline_mode = #tpu.pipeline_mode<synchronous>, transform_indices = @transform_3, window_bounds = array<i64: 1, 128>}, {pipeline_mode = #tpu.pipeline_mode<synchronous>, transform_indices = @transform_4, window_bounds = array<i64: 128, 128>}, {pipeline_mode = #tpu.pipeline_mode<synchronous>, transform_indices = @transform_5, window_bounds = array<i64: 1, 128>}, {pipeline_mode = #tpu.pipeline_mode<synchronous>, transform_indices = @transform_6, window_bounds = array<i64: 128, 128>}, {pipeline_mode = #tpu.pipeline_mode<synchronous>, transform_indices = @transform_7, window_bounds = array<i64: 1, 128>}, {pipeline_mode = #tpu.pipeline_mode<synchronous>, transform_indices = @transform_8, window_bounds = array<i64: 128, 64>}, {pipeline_mode = #tpu.pipeline_mode<synchronous>, transform_indices = @transform_9, window_bounds = array<i64: 1, 64>}, {pipeline_mode = #tpu.pipeline_mode<synchronous>, transform_indices = @transform_10, window_bounds = array<i64: 64, 128>}, {pipeline_mode = #tpu.pipeline_mode<synchronous>, transform_indices = @transform_11, window_bounds = array<i64: 1, 128>}, {pipeline_mode = #tpu.pipeline_mode<synchronous>, transform_indices = @transform_12, window_bounds = array<i64: 128, 128>}, {pipeline_mode = #tpu.pipeline_mode<synchronous>, transform_indices = @transform_13, window_bounds = array<i64: 1, 128>}, {pipeline_mode = #tpu.pipeline_mode<synchronous>, transform_indices = @transform_14, window_bounds = array<i64: 128, 128>}, {pipeline_mode = #tpu.pipeline_mode<synchronous>, transform_indices = @transform_15, window_bounds = array<i64: 1, 128>}, {pipeline_mode = #tpu.pipeline_mode<synchronous>, transform_indices = @transform_16, window_bounds = array<i64: 128, 32>}, {pipeline_mode = #tpu.pipeline_mode<synchronous>, transform_indices = @transform_17, window_bounds = array<i64: 1, 32>}, {pipeline_mode = #tpu.pipeline_mode<synchronous>, transform_indices = @transform_18, window_bounds = array<i64: 64, 128>}, {pipeline_mode = #tpu.pipeline_mode<synchronous>, transform_indices = @transform_19, window_bounds = array<i64: 32, 128>}, {pipeline_mode = #tpu.pipeline_mode<synchronous>, transform_indices = @transform_20, window_bounds = array<i64: 1, 128>}, {pipeline_mode = #tpu.pipeline_mode<synchronous>, transform_indices = @transform_21, window_bounds = array<i64: 128, 128>}, {pipeline_mode = #tpu.pipeline_mode<synchronous>, transform_indices = @transform_22, window_bounds = array<i64: 1, 128>}, {pipeline_mode = #tpu.pipeline_mode<synchronous>, transform_indices = @transform_23, window_bounds = array<i64: 128, 128>}, {pipeline_mode = #tpu.pipeline_mode<synchronous>, transform_indices = @transform_24, window_bounds = array<i64: 1, 128>}, {pipeline_mode = #tpu.pipeline_mode<synchronous>, transform_indices = @transform_25, window_bounds = array<i64: 128, 8>}, {pipeline_mode = #tpu.pipeline_mode<synchronous>, transform_indices = @transform_26, window_bounds = array<i64: 1, 8>}, {transform_indices = @transform_27, window_bounds = array<i64: 8, 8>}, {transform_indices = @transform_28, window_bounds = array<i64: 8, 8>}]} {
    %c0 = arith.constant 0 : index
    %c0_0 = arith.constant 0 : index
    %0 = vector.load %arg1[%c0, %c0_0] : memref<8x64xf32, #tpu.memory_space<vmem>>, vector<8x64xf32>
    %c0_1 = arith.constant 0 : index
    %c0_2 = arith.constant 0 : index
    %1 = vector.load %arg2[%c0_1, %c0_2] : memref<8x32xf32, #tpu.memory_space<vmem>>, vector<8x32xf32>
    %c0_3 = arith.constant 0 : index
    %c0_4 = arith.constant 0 : index
    %2 = vector.load %arg3[%c0_3, %c0_4] : memref<32x128xf32, #tpu.memory_space<vmem>>, vector<32x128xf32>
    %cst = arith.constant dense<0.000000e+00> : vector<8x128xf32>
    %3 = tpu.matmul %1, %2, %cst {dimension_numbers = #tpu.dot_dimension_numbers<[1], [0], [0], [1], [0, 0, 1, 1], [], []>} : vector<8x32xf32>, vector<32x128xf32>, vector<8x128xf32> -> vector<8x128xf32>
    %c0_5 = arith.constant 0 : index
    %c0_6 = arith.constant 0 : index
    %4 = vector.load %arg4[%c0_5, %c0_6] : memref<1x128xf32, #tpu.memory_space<vmem>>, vector<1x128xf32>
    %5 = vector.broadcast %4 : vector<1x128xf32> to vector<8x128xf32>
    %6 = arith.addf %3, %5 : vector<8x128xf32>
    %cst_7 = arith.constant 0.000000e+00 : f32
    %7 = vector.broadcast %cst_7 : f32 to vector<8x128xf32>
    %8 = arith.maximumf %6, %7 : vector<8x128xf32>
    %c0_8 = arith.constant 0 : index
    %c0_9 = arith.constant 0 : index
    %9 = vector.load %arg5[%c0_8, %c0_9] : memref<128x128xf32, #tpu.memory_space<vmem>>, vector<128x128xf32>
    %cst_10 = arith.constant dense<0.000000e+00> : vector<8x128xf32>
    %10 = tpu.matmul %8, %9, %cst_10 {dimension_numbers = #tpu.dot_dimension_numbers<[1], [0], [0], [1], [0, 0, 1, 1], [], []>} : vector<8x128xf32>, vector<128x128xf32>, vector<8x128xf32> -> vector<8x128xf32>
    %c0_11 = arith.constant 0 : index
    %c0_12 = arith.constant 0 : index
    %11 = vector.load %arg6[%c0_11, %c0_12] : memref<1x128xf32, #tpu.memory_space<vmem>>, vector<1x128xf32>
    %12 = vector.broadcast %11 : vector<1x128xf32> to vector<8x128xf32>
    %13 = arith.addf %10, %12 : vector<8x128xf32>
    %cst_13 = arith.constant 0.000000e+00 : f32
    %14 = vector.broadcast %cst_13 : f32 to vector<8x128xf32>
    %15 = arith.maximumf %13, %14 : vector<8x128xf32>
    %c0_14 = arith.constant 0 : index
    %c0_15 = arith.constant 0 : index
    %16 = vector.load %arg7[%c0_14, %c0_15] : memref<128x128xf32, #tpu.memory_space<vmem>>, vector<128x128xf32>
    %cst_16 = arith.constant dense<0.000000e+00> : vector<8x128xf32>
    %17 = tpu.matmul %15, %16, %cst_16 {dimension_numbers = #tpu.dot_dimension_numbers<[1], [0], [0], [1], [0, 0, 1, 1], [], []>} : vector<8x128xf32>, vector<128x128xf32>, vector<8x128xf32> -> vector<8x128xf32>
    %c0_17 = arith.constant 0 : index
    %c0_18 = arith.constant 0 : index
    %18 = vector.load %arg8[%c0_17, %c0_18] : memref<1x128xf32, #tpu.memory_space<vmem>>, vector<1x128xf32>
    %19 = vector.broadcast %18 : vector<1x128xf32> to vector<8x128xf32>
    %20 = arith.addf %17, %19 : vector<8x128xf32>
    %cst_19 = arith.constant 0.000000e+00 : f32
    %21 = vector.broadcast %cst_19 : f32 to vector<8x128xf32>
    %22 = arith.maximumf %20, %21 : vector<8x128xf32>
    %c0_20 = arith.constant 0 : index
    %c0_21 = arith.constant 0 : index
    %23 = vector.load %arg9[%c0_20, %c0_21] : memref<128x64xf32, #tpu.memory_space<vmem>>, vector<128x64xf32>
    %cst_22 = arith.constant dense<0.000000e+00> : vector<8x64xf32>
    %24 = tpu.matmul %22, %23, %cst_22 {dimension_numbers = #tpu.dot_dimension_numbers<[1], [0], [0], [1], [0, 0, 1, 1], [], []>} : vector<8x128xf32>, vector<128x64xf32>, vector<8x64xf32> -> vector<8x64xf32>
    %c0_23 = arith.constant 0 : index
    %c0_24 = arith.constant 0 : index
    %25 = vector.load %arg10[%c0_23, %c0_24] : memref<1x64xf32, #tpu.memory_space<vmem>>, vector<1x64xf32>
    %26 = vector.broadcast %25 : vector<1x64xf32> to vector<8x64xf32>
    %27 = arith.addf %24, %26 : vector<8x64xf32>
    %c0_25 = arith.constant 0 : index
    %c0_26 = arith.constant 0 : index
    %28 = vector.load %arg11[%c0_25, %c0_26] : memref<64x128xf32, #tpu.memory_space<vmem>>, vector<64x128xf32>
    %cst_27 = arith.constant dense<0.000000e+00> : vector<8x128xf32>
    %29 = tpu.matmul %0, %28, %cst_27 {dimension_numbers = #tpu.dot_dimension_numbers<[1], [0], [0], [1], [0, 0, 1, 1], [], []>} : vector<8x64xf32>, vector<64x128xf32>, vector<8x128xf32> -> vector<8x128xf32>
    %c0_28 = arith.constant 0 : index
    %c0_29 = arith.constant 0 : index
    %30 = vector.load %arg12[%c0_28, %c0_29] : memref<1x128xf32, #tpu.memory_space<vmem>>, vector<1x128xf32>
    %31 = vector.broadcast %30 : vector<1x128xf32> to vector<8x128xf32>
    %32 = arith.addf %29, %31 : vector<8x128xf32>
    %cst_30 = arith.constant 0.000000e+00 : f32
    %33 = vector.broadcast %cst_30 : f32 to vector<8x128xf32>
    %34 = arith.maximumf %32, %33 : vector<8x128xf32>
    %c0_31 = arith.constant 0 : index
    %c0_32 = arith.constant 0 : index
    %35 = vector.load %arg13[%c0_31, %c0_32] : memref<128x128xf32, #tpu.memory_space<vmem>>, vector<128x128xf32>
    %cst_33 = arith.constant dense<0.000000e+00> : vector<8x128xf32>
    %36 = tpu.matmul %34, %35, %cst_33 {dimension_numbers = #tpu.dot_dimension_numbers<[1], [0], [0], [1], [0, 0, 1, 1], [], []>} : vector<8x128xf32>, vector<128x128xf32>, vector<8x128xf32> -> vector<8x128xf32>
    %c0_34 = arith.constant 0 : index
    %c0_35 = arith.constant 0 : index
    %37 = vector.load %arg14[%c0_34, %c0_35] : memref<1x128xf32, #tpu.memory_space<vmem>>, vector<1x128xf32>
    %38 = vector.broadcast %37 : vector<1x128xf32> to vector<8x128xf32>
    %39 = arith.addf %36, %38 : vector<8x128xf32>
    %cst_36 = arith.constant 0.000000e+00 : f32
    %40 = vector.broadcast %cst_36 : f32 to vector<8x128xf32>
    %41 = arith.maximumf %39, %40 : vector<8x128xf32>
    %c0_37 = arith.constant 0 : index
    %c0_38 = arith.constant 0 : index
    %42 = vector.load %arg15[%c0_37, %c0_38] : memref<128x128xf32, #tpu.memory_space<vmem>>, vector<128x128xf32>
    %cst_39 = arith.constant dense<0.000000e+00> : vector<8x128xf32>
    %43 = tpu.matmul %41, %42, %cst_39 {dimension_numbers = #tpu.dot_dimension_numbers<[1], [0], [0], [1], [0, 0, 1, 1], [], []>} : vector<8x128xf32>, vector<128x128xf32>, vector<8x128xf32> -> vector<8x128xf32>
    %c0_40 = arith.constant 0 : index
    %c0_41 = arith.constant 0 : index
    %44 = vector.load %arg16[%c0_40, %c0_41] : memref<1x128xf32, #tpu.memory_space<vmem>>, vector<1x128xf32>
    %45 = vector.broadcast %44 : vector<1x128xf32> to vector<8x128xf32>
    %46 = arith.addf %43, %45 : vector<8x128xf32>
    %cst_42 = arith.constant 0.000000e+00 : f32
    %47 = vector.broadcast %cst_42 : f32 to vector<8x128xf32>
    %48 = arith.maximumf %46, %47 : vector<8x128xf32>
    %c0_43 = arith.constant 0 : index
    %c0_44 = arith.constant 0 : index
    %49 = vector.load %arg17[%c0_43, %c0_44] : memref<128x32xf32, #tpu.memory_space<vmem>>, vector<128x32xf32>
    %cst_45 = arith.constant dense<0.000000e+00> : vector<8x32xf32>
    %50 = tpu.matmul %48, %49, %cst_45 {dimension_numbers = #tpu.dot_dimension_numbers<[1], [0], [0], [1], [0, 0, 1, 1], [], []>} : vector<8x128xf32>, vector<128x32xf32>, vector<8x32xf32> -> vector<8x32xf32>
    %c0_46 = arith.constant 0 : index
    %c0_47 = arith.constant 0 : index
    %51 = vector.load %arg18[%c0_46, %c0_47] : memref<1x32xf32, #tpu.memory_space<vmem>>, vector<1x32xf32>
    %52 = vector.broadcast %51 : vector<1x32xf32> to vector<8x32xf32>
    %53 = arith.addf %50, %52 : vector<8x32xf32>
    %54 = tpu.concatenate %0, %27 in 0 : vector<8x64xf32>, vector<8x64xf32> -> vector<16x64xf32>
    %55 = tpu.concatenate %53, %1 in 0 : vector<8x32xf32>, vector<8x32xf32> -> vector<16x32xf32>
    %c0_48 = arith.constant 0 : index
    %c0_49 = arith.constant 0 : index
    %56 = vector.load %arg19[%c0_48, %c0_49] : memref<64x128xf32, #tpu.memory_space<vmem>>, vector<64x128xf32>
    %cst_50 = arith.constant dense<0.000000e+00> : vector<16x128xf32>
    %57 = tpu.matmul %54, %56, %cst_50 {dimension_numbers = #tpu.dot_dimension_numbers<[1], [0], [0], [1], [0, 0, 1, 1], [], []>} : vector<16x64xf32>, vector<64x128xf32>, vector<16x128xf32> -> vector<16x128xf32>
    %c0_51 = arith.constant 0 : index
    %c0_52 = arith.constant 0 : index
    %58 = vector.load %arg20[%c0_51, %c0_52] : memref<32x128xf32, #tpu.memory_space<vmem>>, vector<32x128xf32>
    %cst_53 = arith.constant dense<0.000000e+00> : vector<16x128xf32>
    %59 = tpu.matmul %55, %58, %cst_53 {dimension_numbers = #tpu.dot_dimension_numbers<[1], [0], [0], [1], [0, 0, 1, 1], [], []>} : vector<16x32xf32>, vector<32x128xf32>, vector<16x128xf32> -> vector<16x128xf32>
    %60 = arith.addf %57, %59 : vector<16x128xf32>
    %c0_54 = arith.constant 0 : index
    %c0_55 = arith.constant 0 : index
    %61 = vector.load %arg21[%c0_54, %c0_55] : memref<1x128xf32, #tpu.memory_space<vmem>>, vector<1x128xf32>
    %62 = vector.broadcast %61 : vector<1x128xf32> to vector<16x128xf32>
    %63 = arith.addf %60, %62 : vector<16x128xf32>
    %cst_56 = arith.constant 0.000000e+00 : f32
    %64 = vector.broadcast %cst_56 : f32 to vector<16x128xf32>
    %65 = arith.maximumf %63, %64 : vector<16x128xf32>
    %c0_57 = arith.constant 0 : index
    %c0_58 = arith.constant 0 : index
    %66 = vector.load %arg22[%c0_57, %c0_58] : memref<128x128xf32, #tpu.memory_space<vmem>>, vector<128x128xf32>
    %cst_59 = arith.constant dense<0.000000e+00> : vector<16x128xf32>
    %67 = tpu.matmul %65, %66, %cst_59 {dimension_numbers = #tpu.dot_dimension_numbers<[1], [0], [0], [1], [0, 0, 1, 1], [], []>} : vector<16x128xf32>, vector<128x128xf32>, vector<16x128xf32> -> vector<16x128xf32>
    %c0_60 = arith.constant 0 : index
    %c0_61 = arith.constant 0 : index
    %68 = vector.load %arg23[%c0_60, %c0_61] : memref<1x128xf32, #tpu.memory_space<vmem>>, vector<1x128xf32>
    %69 = vector.broadcast %68 : vector<1x128xf32> to vector<16x128xf32>
    %70 = arith.addf %67, %69 : vector<16x128xf32>
    %cst_62 = arith.constant 0.000000e+00 : f32
    %71 = vector.broadcast %cst_62 : f32 to vector<16x128xf32>
    %72 = arith.maximumf %70, %71 : vector<16x128xf32>
    %c0_63 = arith.constant 0 : index
    %c0_64 = arith.constant 0 : index
    %73 = vector.load %arg24[%c0_63, %c0_64] : memref<128x128xf32, #tpu.memory_space<vmem>>, vector<128x128xf32>
    %cst_65 = arith.constant dense<0.000000e+00> : vector<16x128xf32>
    %74 = tpu.matmul %72, %73, %cst_65 {dimension_numbers = #tpu.dot_dimension_numbers<[1], [0], [0], [1], [0, 0, 1, 1], [], []>} : vector<16x128xf32>, vector<128x128xf32>, vector<16x128xf32> -> vector<16x128xf32>
    %c0_66 = arith.constant 0 : index
    %c0_67 = arith.constant 0 : index
    %75 = vector.load %arg25[%c0_66, %c0_67] : memref<1x128xf32, #tpu.memory_space<vmem>>, vector<1x128xf32>
    %76 = vector.broadcast %75 : vector<1x128xf32> to vector<16x128xf32>
    %77 = arith.addf %74, %76 : vector<16x128xf32>
    %cst_68 = arith.constant 0.000000e+00 : f32
    %78 = vector.broadcast %cst_68 : f32 to vector<16x128xf32>
    %79 = arith.maximumf %77, %78 : vector<16x128xf32>
    %c0_69 = arith.constant 0 : index
    %c0_70 = arith.constant 0 : index
    %80 = vector.load %arg26[%c0_69, %c0_70] : memref<128x8xf32, #tpu.memory_space<vmem>>, vector<128x8xf32>
    %cst_71 = arith.constant dense<0.000000e+00> : vector<16x8xf32>
    %81 = tpu.matmul %79, %80, %cst_71 {dimension_numbers = #tpu.dot_dimension_numbers<[1], [0], [0], [1], [0, 0, 1, 1], [], []>} : vector<16x128xf32>, vector<128x8xf32>, vector<16x8xf32> -> vector<16x8xf32>
    %c0_72 = arith.constant 0 : index
    %c0_73 = arith.constant 0 : index
    %82 = vector.load %arg27[%c0_72, %c0_73] : memref<1x8xf32, #tpu.memory_space<vmem>>, vector<1x8xf32>
    %83 = vector.broadcast %82 : vector<1x8xf32> to vector<16x8xf32>
    %84 = arith.addf %81, %83 : vector<16x8xf32>
    %cst_74 = arith.constant 0.000000e+00 : f32
    %85 = vector.broadcast %cst_74 : f32 to vector<16x8xf32>
    %86 = arith.subf %85, %84 : vector<16x8xf32>
    %87 = math.exp %86 : vector<16x8xf32>
    %cst_75 = arith.constant 1.000000e+00 : f32
    %88 = vector.broadcast %cst_75 : f32 to vector<16x8xf32>
    %89 = arith.addf %88, %87 : vector<16x8xf32>
    %cst_76 = arith.constant 1.000000e+00 : f32
    %90 = vector.broadcast %cst_76 : f32 to vector<16x8xf32>
    %91 = arith.divf %90, %89 : vector<16x8xf32>
    %92 = vector.extract_strided_slice %91 {offsets = [0, 0], sizes = [8, 8], strides = [1, 1]} : vector<16x8xf32> to vector<8x8xf32>
    %c0_77 = arith.constant 0 : index
    %c0_78 = arith.constant 0 : index
    %93 = vector.load %arg28[%c0_77, %c0_78] : memref<8x8xf32, #tpu.memory_space<vmem>>, vector<8x8xf32>
    tpu.vector_store %arg28[%c0_77, %c0_78], %92 {strides = array<i32>} : memref<8x8xf32, #tpu.memory_space<vmem>>, vector<8x8xf32>,
    %94 = vector.extract_strided_slice %91 {offsets = [8, 0], sizes = [8, 8], strides = [1, 1]} : vector<16x8xf32> to vector<8x8xf32>
    %c0_79 = arith.constant 0 : index
    %c0_80 = arith.constant 0 : index
    %95 = vector.load %arg29[%c0_79, %c0_80] : memref<8x8xf32, #tpu.memory_space<vmem>>, vector<8x8xf32>
    tpu.vector_store %arg29[%c0_79, %c0_80], %94 {strides = array<i32>} : memref<8x8xf32, #tpu.memory_space<vmem>>, vector<8x8xf32>,
    return
  }
  func.func @transform_0(%arg0: i32) -> (i32, i32) {
    %c0_i32 = arith.constant 0 : i32
    %c0_i32_0 = arith.constant 0 : i32
    return %arg0, %c0_i32 : i32, i32
  }
  func.func @transform_1(%arg0: i32) -> (i32, i32) {
    %c0_i32 = arith.constant 0 : i32
    %c0_i32_0 = arith.constant 0 : i32
    return %arg0, %c0_i32 : i32, i32
  }
  func.func @transform_2(%arg0: i32) -> (i32, i32) {
    %c0_i32 = arith.constant 0 : i32
    %c0_i32_0 = arith.constant 0 : i32
    %c0_i32_1 = arith.constant 0 : i32
    return %c0_i32, %c0_i32_0 : i32, i32
  }
  func.func @transform_3(%arg0: i32) -> (i32, i32) {
    %c0_i32 = arith.constant 0 : i32
    %c0_i32_0 = arith.constant 0 : i32
    %c0_i32_1 = arith.constant 0 : i32
    return %c0_i32, %c0_i32_0 : i32, i32
  }
  func.func @transform_4(%arg0: i32) -> (i32, i32) {
    %c0_i32 = arith.constant 0 : i32
    %c0_i32_0 = arith.constant 0 : i32
    %c0_i32_1 = arith.constant 0 : i32
    return %c0_i32, %c0_i32_0 : i32, i32
  }
  func.func @transform_5(%arg0: i32) -> (i32, i32) {
    %c0_i32 = arith.constant 0 : i32
    %c0_i32_0 = arith.constant 0 : i32
    %c0_i32_1 = arith.constant 0 : i32
    return %c0_i32, %c0_i32_0 : i32, i32
  }
  func.func @transform_6(%arg0: i32) -> (i32, i32) {
    %c0_i32 = arith.constant 0 : i32
    %c0_i32_0 = arith.constant 0 : i32
    %c0_i32_1 = arith.constant 0 : i32
    return %c0_i32, %c0_i32_0 : i32, i32
  }
  func.func @transform_7(%arg0: i32) -> (i32, i32) {
    %c0_i32 = arith.constant 0 : i32
    %c0_i32_0 = arith.constant 0 : i32
    %c0_i32_1 = arith.constant 0 : i32
    return %c0_i32, %c0_i32_0 : i32, i32
  }
  func.func @transform_8(%arg0: i32) -> (i32, i32) {
    %c0_i32 = arith.constant 0 : i32
    %c0_i32_0 = arith.constant 0 : i32
    %c0_i32_1 = arith.constant 0 : i32
    return %c0_i32, %c0_i32_0 : i32, i32
  }
  func.func @transform_9(%arg0: i32) -> (i32, i32) {
    %c0_i32 = arith.constant 0 : i32
    %c0_i32_0 = arith.constant 0 : i32
    %c0_i32_1 = arith.constant 0 : i32
    return %c0_i32, %c0_i32_0 : i32, i32
  }
  func.func @transform_10(%arg0: i32) -> (i32, i32) {
    %c0_i32 = arith.constant 0 : i32
    %c0_i32_0 = arith.constant 0 : i32
    %c0_i32_1 = arith.constant 0 : i32
    return %c0_i32, %c0_i32_0 : i32, i32
  }
  func.func @transform_11(%arg0: i32) -> (i32, i32) {
    %c0_i32 = arith.constant 0 : i32
    %c0_i32_0 = arith.constant 0 : i32
    %c0_i32_1 = arith.constant 0 : i32
    return %c0_i32, %c0_i32_0 : i32, i32
  }
  func.func @transform_12(%arg0: i32) -> (i32, i32) {
    %c0_i32 = arith.constant 0 : i32
    %c0_i32_0 = arith.constant 0 : i32
    %c0_i32_1 = arith.constant 0 : i32
    return %c0_i32, %c0_i32_0 : i32, i32
  }
  func.func @transform_13(%arg0: i32) -> (i32, i32) {
    %c0_i32 = arith.constant 0 : i32
    %c0_i32_0 = arith.constant 0 : i32
    %c0_i32_1 = arith.constant 0 : i32
    return %c0_i32, %c0_i32_0 : i32, i32
  }
  func.func @transform_14(%arg0: i32) -> (i32, i32) {
    %c0_i32 = arith.constant 0 : i32
    %c0_i32_0 = arith.constant 0 : i32
    %c0_i32_1 = arith.constant 0 : i32
    return %c0_i32, %c0_i32_0 : i32, i32
  }
  func.func @transform_15(%arg0: i32) -> (i32, i32) {
    %c0_i32 = arith.constant 0 : i32
    %c0_i32_0 = arith.constant 0 : i32
    %c0_i32_1 = arith.constant 0 : i32
    return %c0_i32, %c0_i32_0 : i32, i32
  }
  func.func @transform_16(%arg0: i32) -> (i32, i32) {
    %c0_i32 = arith.constant 0 : i32
    %c0_i32_0 = arith.constant 0 : i32
    %c0_i32_1 = arith.constant 0 : i32
    return %c0_i32, %c0_i32_0 : i32, i32
  }
  func.func @transform_17(%arg0: i32) -> (i32, i32) {
    %c0_i32 = arith.constant 0 : i32
    %c0_i32_0 = arith.constant 0 : i32
    %c0_i32_1 = arith.constant 0 : i32
    return %c0_i32, %c0_i32_0 : i32, i32
  }
  func.func @transform_18(%arg0: i32) -> (i32, i32) {
    %c0_i32 = arith.constant 0 : i32
    %c0_i32_0 = arith.constant 0 : i32
    %c0_i32_1 = arith.constant 0 : i32
    return %c0_i32, %c0_i32_0 : i32, i32
  }
  func.func @transform_19(%arg0: i32) -> (i32, i32) {
    %c0_i32 = arith.constant 0 : i32
    %c0_i32_0 = arith.constant 0 : i32
    %c0_i32_1 = arith.constant 0 : i32
    return %c0_i32, %c0_i32_0 : i32, i32
  }
  func.func @transform_20(%arg0: i32) -> (i32, i32) {
    %c0_i32 = arith.constant 0 : i32
    %c0_i32_0 = arith.constant 0 : i32
    %c0_i32_1 = arith.constant 0 : i32
    return %c0_i32, %c0_i32_0 : i32, i32
  }
  func.func @transform_21(%arg0: i32) -> (i32, i32) {
    %c0_i32 = arith.constant 0 : i32
    %c0_i32_0 = arith.constant 0 : i32
    %c0_i32_1 = arith.constant 0 : i32
    return %c0_i32, %c0_i32_0 : i32, i32
  }
  func.func @transform_22(%arg0: i32) -> (i32, i32) {
    %c0_i32 = arith.constant 0 : i32
    %c0_i32_0 = arith.constant 0 : i32
    %c0_i32_1 = arith.constant 0 : i32
    return %c0_i32, %c0_i32_0 : i32, i32
  }
  func.func @transform_23(%arg0: i32) -> (i32, i32) {
    %c0_i32 = arith.constant 0 : i32
    %c0_i32_0 = arith.constant 0 : i32
    %c0_i32_1 = arith.constant 0 : i32
    return %c0_i32, %c0_i32_0 : i32, i32
  }
  func.func @transform_24(%arg0: i32) -> (i32, i32) {
    %c0_i32 = arith.constant 0 : i32
    %c0_i32_0 = arith.constant 0 : i32
    %c0_i32_1 = arith.constant 0 : i32
    return %c0_i32, %c0_i32_0 : i32, i32
  }
  func.func @transform_25(%arg0: i32) -> (i32, i32) {
    %c0_i32 = arith.constant 0 : i32
    %c0_i32_0 = arith.constant 0 : i32
    %c0_i32_1 = arith.constant 0 : i32
    return %c0_i32, %c0_i32_0 : i32, i32
  }
  func.func @transform_26(%arg0: i32) -> (i32, i32) {
    %c0_i32 = arith.constant 0 : i32
    %c0_i32_0 = arith.constant 0 : i32
    %c0_i32_1 = arith.constant 0 : i32
    return %c0_i32, %c0_i32_0 : i32, i32
  }
  func.func @transform_27(%arg0: i32) -> (i32, i32) {
    %c0_i32 = arith.constant 0 : i32
    %c0_i32_0 = arith.constant 0 : i32
    return %arg0, %c0_i32 : i32, i32
  }
  func.func @transform_28(%arg0: i32) -> (i32, i32) {
    %c0_i32 = arith.constant 0 : i32
    %c0_i32_0 = arith.constant 0 : i32
    return %arg0, %c0_i32 : i32, i32
  }
}

</mosaic_0001>

<llo_original>
// kernel: bigan_forward.1
$region0: #{bigan_forward.1}
  #allocation0 [shape = 'u32[]', space=smem, size = 0x4, offset = 0x4, fixed_abs, tag = 'smem constant byte address 0x4 - core index']
  #allocation1 [shape = 'u32[144,128]{1,0:T(1,128)}', space=vmem, size = 0x12000, scoped, tag = 'internal scratch']
  %s0 = inlined_call_operand.hbm [shape: f32[8,64], index: 0, kind: input, shape index: {}]
  %s1 = inlined_call_operand.hbm [shape: f32[8,32], index: 1, kind: input, shape index: {}]
  %s2 = inlined_call_operand.hbm [shape: f32[32,128], index: 2, kind: input, shape index: {}]
  %s3 = inlined_call_operand.vmem [shape: f32[1,128], index: 3, kind: input, shape index: {}]
  %s4 = inlined_call_operand.vmem [shape: f32[128,128], index: 4, kind: input, shape index: {}]
  %s5 = inlined_call_operand.vmem [shape: f32[1,128], index: 5, kind: input, shape index: {}]
  %s6 = inlined_call_operand.vmem [shape: f32[128,128], index: 6, kind: input, shape index: {}]
  %s7 = inlined_call_operand.vmem [shape: f32[1,128], index: 7, kind: input, shape index: {}]
  %s8 = inlined_call_operand.vmem [shape: f32[128,64], index: 8, kind: input, shape index: {}]
  %s9 = inlined_call_operand.vmem [shape: f32[1,64], index: 9, kind: input, shape index: {}]
  %s10 = inlined_call_operand.hbm [shape: f32[64,128], index: 10, kind: input, shape index: {}]
  %s11 = inlined_call_operand.hbm [shape: f32[1,128], index: 11, kind: input, shape index: {}]
  %s12 = inlined_call_operand.vmem [shape: f32[128,128], index: 12, kind: input, shape index: {}]
  %s13 = inlined_call_operand.hbm [shape: f32[1,128], index: 13, kind: input, shape index: {}]
  %s14 = inlined_call_operand.vmem [shape: f32[128,128], index: 14, kind: input, shape index: {}]
  %s15 = inlined_call_operand.hbm [shape: f32[1,128], index: 15, kind: input, shape index: {}]
  %s16 = inlined_call_operand.vmem [shape: f32[128,32], index: 16, kind: input, shape index: {}]
  %s17 = inlined_call_operand.vmem [shape: f32[1,32], index: 17, kind: input, shape index: {}]
  %s18 = inlined_call_operand.hbm [shape: f32[64,128], index: 18, kind: input, shape index: {}]
  %s19 = inlined_call_operand.hbm [shape: f32[32,128], index: 19, kind: input, shape index: {}]
  %s20 = inlined_call_operand.hbm [shape: f32[1,128], index: 20, kind: input, shape index: {}]
  %s21 = inlined_call_operand.hbm [shape: f32[128,128], index: 21, kind: input, shape index: {}]
  %s22 = inlined_call_operand.hbm [shape: f32[1,128], index: 22, kind: input, shape index: {}]
  %s23 = inlined_call_operand.hbm [shape: f32[128,128], index: 23, kind: input, shape index: {}]
  %s24 = inlined_call_operand.hbm [shape: f32[1,128], index: 24, kind: input, shape index: {}]
  %s25 = inlined_call_operand.vmem [shape: f32[128,8], index: 25, kind: input, shape index: {}]
  %s26 = inlined_call_operand.hbm [shape: f32[1,8], index: 26, kind: input, shape index: {}]
  %s27 = inlined_call_operand.vmem [shape: f32[8,8], index: 27, kind: output, shape index: {0}]
  %s28 = inlined_call_operand.vmem [shape: f32[8,8], index: 28, kind: output, shape index: {1}]
  %29 = xla_tuple %s27, %s28
  %s30 = sld [smem:[#allocation0]]
  $region186: #{bigan_forward.1} parent=0
    _
  %s32 = ssub.s32 1, %s30
  %s33 = scalar_select 0, %s32, %s30
  $region1: #{bigan_forward.1} parent=0
    #allocation2 [shape = 'u8[4096]{0}', space=vmem, size = 0x1000, scoped, tag = 'input window, operand 0, single buffered']
    #allocation3 [shape = 's32[1]{0}', space=sflag, size = 0x4, scoped, tag = 'scoped memory for bigan_forward.1']
    #allocation4 [shape = 'u8[4096]{0}', space=vmem, size = 0x1000, scoped, tag = 'input window, operand 1, single buffered']
    #allocation5 [shape = 's32[1]{0}', space=sflag, size = 0x4, scoped, tag = 'scoped memory for bigan_forward.1']
    #allocation6 [shape = 'u8[16384]{0}', space=vmem, size = 0x4000, scoped, tag = 'input window, operand 2, single buffered']
    #allocation7 [shape = 'u8[32768]{0}', space=vmem, size = 0x8000, scoped, tag = 'input window, operand 10, single buffered']
    #allocation8 [shape = 's32[1]{0}', space=sflag, size = 0x4, scoped, tag = 'scoped memory for bigan_forward.1']
    #allocation9 [shape = 'u8[512]{0}', space=vmem, size = 0x400, scoped, tag = 'input window, operand 11, single buffered']
    #allocation10 [shape = 'u8[512]{0}', space=vmem, size = 0x400, scoped, tag = 'input window, operand 13, single buffered']
    #allocation11 [shape = 's32[1]{0}', space=sflag, size = 0x4, scoped, tag = 'scoped memory for bigan_forward.1']
    #allocation12 [shape = 'u8[512]{0}', space=vmem, size = 0x400, scoped, tag = 'input window, operand 15, single buffered']
    #allocation13 [shape = 'u8[32768]{0}', space=vmem, size = 0x8000, scoped, tag = 'input window, operand 18, single buffered']
    #allocation14 [shape = 's32[1]{0}', space=sflag, size = 0x4, scoped, tag = 'scoped memory for bigan_forward.1']
    #allocation15 [shape = 'u8[16384]{0}', space=vmem, size = 0x4000, scoped, tag = 'input window, operand 19, single buffered']
    #allocation16 [shape = 'u8[512]{0}', space=vmem, size = 0x400, scoped, tag = 'input window, operand 20, single buffered']
    #allocation17 [shape = 's32[1]{0}', space=sflag, size = 0x4, scoped, tag = 'scoped memory for bigan_forward.1']
    #allocation18 [shape = 'u8[65536]{0}', space=vmem, size = 0x10000, scoped, tag = 'input window, operand 21, single buffered']
    #allocation19 [shape = 'u8[512]{0}', space=vmem, size = 0x400, scoped, tag = 'input window, operand 22, single buffered']
    #allocation20 [shape = 's32[1]{0}', space=sflag, size = 0x4, scoped, tag = 'scoped memory for bigan_forward.1']
    #allocation21 [shape = 'u8[65536]{0}', space=vmem, size = 0x10000, scoped, tag = 'input window, operand 23, single buffered']
    #allocation22 [shape = 'u8[512]{0}', space=vmem, size = 0x400, scoped, tag = 'input window, operand 24, single buffered']
    #allocation23 [shape = 's32[1]{0}', space=sflag, size = 0x4, scoped, tag = 'scoped memory for bigan_forward.1']
    #allocation24 [shape = 'u8[512]{0}', space=vmem, size = 0x400, scoped, tag = 'input window, operand 26, single buffered']
    %34 = vsyncpa [#allocation3], 0
    %35 = vsyncpa [#allocation5], 0
    %36 = vsyncpa [#allocation8], 0
    %37 = vsyncpa [#allocation11], 0
    %38 = vsyncpa [#allocation14], 0
    %39 = vsyncpa [#allocation17], 0
    %40 = vsyncpa [#allocation20], 0
    %41 = vsyncpa [#allocation23], 0
    // Predicated region
    $region2: #{bigan_forward.1} parent=1 // pred_check
      _
    $region3: #{bigan_forward.1} parent=1 // pred_check_branch
      %43 = sbr.rel (0) target = $region5
    $region4: #{bigan_forward.1} parent=1 // pred_region
      %s45 = ssub.s32 128, 128
      %46 = vsyncadd [#allocation3], %s45
      %s48 = sshll.u32 [#allocation2], 4
      %s49 = int_to_ptr.vmem [resolvable:$true] %s48
      %51 = dma.hbm_to_vmem [thread:$0]  %s0, 128, %s49, [#allocation3]
    $region5: #{bigan_forward.1} parent=1 // pred_fallthru
      _
    // Predicated region
    $region6: #{bigan_forward.1} parent=1 // pred_check
      _
    $region7: #{bigan_forward.1} parent=1 // pred_check_branch
      %53 = sbr.rel (0) target = $region9
    $region8: #{bigan_forward.1} parent=1 // pred_region
      %s55 = ssub.s32 128, 128
      %56 = vsyncadd [#allocation5], %s55
      %s58 = sshll.u32 [#allocation4], 4
      %s59 = int_to_ptr.vmem [resolvable:$true] %s58
      %61 = dma.hbm_to_vmem [thread:$0]  %s1, 128, %s59, [#allocation5]
    $region9: #{bigan_forward.1} parent=1 // pred_fallthru
      _
    // Predicated region
    $region10: #{bigan_forward.1} parent=1 // pred_check
      _
    $region11: #{bigan_forward.1} parent=1 // pred_check_branch
      %63 = sbr.rel (0) target = $region13
    $region12: #{bigan_forward.1} parent=1 // pred_region
      %s65 = ssub.s32 512, 512
      %66 = vsyncadd [#allocation5], %s65
      %s67 = sshll.u32 [#allocation6], 4
      %s68 = int_to_ptr.vmem [resolvable:$true] %s67
      %73 = dma.hbm_to_vmem [thread:$0]  %s2, 512, %s68, [#allocation5], 128, 128, 8
    $region13: #{bigan_forward.1} parent=1 // pred_fallthru
      _
    // Predicated region
    $region14: #{bigan_forward.1} parent=1 // pred_check
      _
    $region15: #{bigan_forward.1} parent=1 // pred_check_branch
      %75 = sbr.rel (0) target = $region17
    $region16: #{bigan_forward.1} parent=1 // pred_region
      _
    $region17: #{bigan_forward.1} parent=1 // pred_fallthru
      _
    // Predicated region
    $region18: #{bigan_forward.1} parent=1 // pred_check
      _
    $region19: #{bigan_forward.1} parent=1 // pred_check_branch
      %77 = sbr.rel (0) target = $region21
    $region20: #{bigan_forward.1} parent=1 // pred_region
      _
    $region21: #{bigan_forward.1} parent=1 // pred_fallthru
      _
    // Predicated region
    $region22: #{bigan_forward.1} parent=1 // pred_check
      _
    $region23: #{bigan_forward.1} parent=1 // pred_check_branch
      %79 = sbr.rel (0) target = $region25
    $region24: #{bigan_forward.1} parent=1 // pred_region
      _
    $region25: #{bigan_forward.1} parent=1 // pred_fallthru
      _
    // Predicated region
    $region26: #{bigan_forward.1} parent=1 // pred_check
      _
    $region27: #{bigan_forward.1} parent=1 // pred_check_branch
      %81 = sbr.rel (0) target = $region29
    $region28: #{bigan_forward.1} parent=1 // pred_region
      _
    $region29: #{bigan_forward.1} parent=1 // pred_fallthru
      _
    // Predicated region
    $region30: #{bigan_forward.1} parent=1 // pred_check
      _
    $region31: #{bigan_forward.1} parent=1 // pred_check_branch
      %83 = sbr.rel (0) target = $region33
    $region32: #{bigan_forward.1} parent=1 // pred_region
      _
    $region33: #{bigan_forward.1} parent=1 // pred_fallthru
      _
    // Predicated region
    $region34: #{bigan_forward.1} parent=1 // pred_check
      _
    $region35: #{bigan_forward.1} parent=1 // pred_check_branch
      %85 = sbr.rel (0) target = $region37
    $region36: #{bigan_forward.1} parent=1 // pred_region
      _
    $region37: #{bigan_forward.1} parent=1 // pred_fallthru
      _
    // Predicated region
    $region38: #{bigan_forward.1} parent=1 // pred_check
      _
    $region39: #{bigan_forward.1} parent=1 // pred_check_branch
      %87 = sbr.rel (0) target = $region41
    $region40: #{bigan_forward.1} parent=1 // pred_region
      _
    $region41: #{bigan_forward.1} parent=1 // pred_fallthru
      _
    // Predicated region
    $region42: #{bigan_forward.1} parent=1 // pred_check
      _
    $region43: #{bigan_forward.1} parent=1 // pred_check_branch
      %89 = sbr.rel (0) target = $region45
    $region44: #{bigan_forward.1} parent=1 // pred_region
      %s91 = ssub.s32 1024, 1024
      %92 = vsyncadd [#allocation8], %s91
      %s93 = sshll.u32 [#allocation7], 4
      %s94 = int_to_ptr.vmem [resolvable:$true] %s93
      %99 = dma.hbm_to_vmem [thread:$0]  %s10, 1024, %s94, [#allocation8], 128, 128, 8
    $region45: #{bigan_forward.1} parent=1 // pred_fallthru
      _
    // Predicated region
    $region46: #{bigan_forward.1} parent=1 // pred_check
      _
    $region47: #{bigan_forward.1} parent=1 // pred_check_branch
      %101 = sbr.rel (0) target = $region49
    $region48: #{bigan_forward.1} parent=1 // pred_region
      %s103 = ssub.s32 16, 16
      %104 = vsyncadd [#allocation8], %s103
      %s106 = sshll.u32 [#allocation9], 4
      %s107 = int_to_ptr.vmem [resolvable:$true] %s106
      %109 = dma.hbm_to_vmem [thread:$0]  %s11, 16, %s107, [#allocation8]
    $region49: #{bigan_forward.1} parent=1 // pred_fallthru
      _
    // Predicated region
    $region50: #{bigan_forward.1} parent=1 // pred_check
      _
    $region51: #{bigan_forward.1} parent=1 // pred_check_branch
      %111 = sbr.rel (0) target = $region53
    $region52: #{bigan_forward.1} parent=1 // pred_region
      _
    $region53: #{bigan_forward.1} parent=1 // pred_fallthru
      _
    // Predicated region
    $region54: #{bigan_forward.1} parent=1 // pred_check
      _
    $region55: #{bigan_forward.1} parent=1 // pred_check_branch
      %113 = sbr.rel (0) target = $region57
    $region56: #{bigan_forward.1} parent=1 // pred_region
      %s115 = ssub.s32 16, 16
      %116 = vsyncadd [#allocation11], %s115
      %s118 = sshll.u32 [#allocation10], 4
      %s119 = int_to_ptr.vmem [resolvable:$true] %s118
      %121 = dma.hbm_to_vmem [thread:$0]  %s13, 16, %s119, [#allocation11]
    $region57: #{bigan_forward.1} parent=1 // pred_fallthru
      _
    // Predicated region
    $region58: #{bigan_forward.1} parent=1 // pred_check
      _
    $region59: #{bigan_forward.1} parent=1 // pred_check_branch
      %123 = sbr.rel (0) target = $region61
    $region60: #{bigan_forward.1} parent=1 // pred_region
      _
    $region61: #{bigan_forward.1} parent=1 // pred_fallthru
      _
    // Predicated region
    $region62: #{bigan_forward.1} parent=1 // pred_check
      _
    $region63: #{bigan_forward.1} parent=1 // pred_check_branch
      %125 = sbr.rel (0) target = $region65
    $region64: #{bigan_forward.1} parent=1 // pred_region
      %s127 = ssub.s32 16, 16
      %128 = vsyncadd [#allocation11], %s127
      %s130 = sshll.u32 [#allocation12], 4
      %s131 = int_to_ptr.vmem [resolvable:$true] %s130
      %133 = dma.hbm_to_vmem [thread:$0]  %s15, 16, %s131, [#allocation11]
    $region65: #{bigan_forward.1} parent=1 // pred_fallthru
      _
    // Predicated region
    $region66: #{bigan_forward.1} parent=1 // pred_check
      _
    $region67: #{bigan_forward.1} parent=1 // pred_check_branch
      %135 = sbr.rel (0) target = $region69
    $region68: #{bigan_forward.1} parent=1 // pred_region
      _
    $region69: #{bigan_forward.1} parent=1 // pred_fallthru
      _
    // Predicated region
    $region70: #{bigan_forward.1} parent=1 // pred_check
      _
    $region71: #{bigan_forward.1} parent=1 // pred_check_branch
      %137 = sbr.rel (0) target = $region73
    $region72: #{bigan_forward.1} parent=1 // pred_region
      _
    $region73: #{bigan_forward.1} parent=1 // pred_fallthru
      _
    // Predicated region
    $region74: #{bigan_forward.1} parent=1 // pred_check
      _
    $region75: #{bigan_forward.1} parent=1 // pred_check_branch
      %139 = sbr.rel (0) target = $region77
    $region76: #{bigan_forward.1} parent=1 // pred_region
      %s141 = ssub.s32 1024, 1024
      %142 = vsyncadd [#allocation14], %s141
      %s143 = sshll.u32 [#allocation13], 4
      %s144 = int_to_ptr.vmem [resolvable:$true] %s143
      %149 = dma.hbm_to_vmem [thread:$0]  %s18, 1024, %s144, [#allocation14], 128, 128, 8
    $region77: #{bigan_forward.1} parent=1 // pred_fallthru
      _
    // Predicated region
    $region78: #{bigan_forward.1} parent=1 // pred_check
      _
    $region79: #{bigan_forward.1} parent=1 // pred_check_branch
      %151 = sbr.rel (0) target = $region81
    $region80: #{bigan_forward.1} parent=1 // pred_region
      %s153 = ssub.s32 512, 512
      %154 = vsyncadd [#allocation14], %s153
      %s155 = sshll.u32 [#allocation15], 4
      %s156 = int_to_ptr.vmem [resolvable:$true] %s155
      %161 = dma.hbm_to_vmem [thread:$0]  %s19, 512, %s156, [#allocation14], 128, 128, 8
    $region81: #{bigan_forward.1} parent=1 // pred_fallthru
      _
    // Predicated region
    $region82: #{bigan_forward.1} parent=1 // pred_check
      _
    $region83: #{bigan_forward.1} parent=1 // pred_check_branch
      %163 = sbr.rel (0) target = $region85
    $region84: #{bigan_forward.1} parent=1 // pred_region
      %s165 = ssub.s32 16, 16
      %166 = vsyncadd [#allocation17], %s165
      %s168 = sshll.u32 [#allocation16], 4
      %s169 = int_to_ptr.vmem [resolvable:$true] %s168
      %171 = dma.hbm_to_vmem [thread:$0]  %s20, 16, %s169, [#allocation17]
    $region85: #{bigan_forward.1} parent=1 // pred_fallthru
      _
    // Predicated region
    $region86: #{bigan_forward.1} parent=1 // pred_check
      _
    $region87: #{bigan_forward.1} parent=1 // pred_check_branch
      %173 = sbr.rel (0) target = $region89
    $region88: #{bigan_forward.1} parent=1 // pred_region
      %s175 = ssub.s32 2048, 2048
      %176 = vsyncadd [#allocation17], %s175
      %s177 = sshll.u32 [#allocation18], 4
      %s178 = int_to_ptr.vmem [resolvable:$true] %s177
      %183 = dma.hbm_to_vmem [thread:$0]  %s21, 2048, %s178, [#allocation17], 128, 128, 8
    $region89: #{bigan_forward.1} parent=1 // pred_fallthru
      _
    // Predicated region
    $region90: #{bigan_forward.1} parent=1 // pred_check
      _
    $region91: #{bigan_forward.1} parent=1 // pred_check_branch
      %185 = sbr.rel (0) target = $region93
    $region92: #{bigan_forward.1} parent=1 // pred_region
      %s187 = ssub.s32 16, 16
      %188 = vsyncadd [#allocation20], %s187
      %s190 = sshll.u32 [#allocation19], 4
      %s191 = int_to_ptr.vmem [resolvable:$true] %s190
      %193 = dma.hbm_to_vmem [thread:$0]  %s22, 16, %s191, [#allocation20]
    $region93: #{bigan_forward.1} parent=1 // pred_fallthru
      _
    // Predicated region
    $region94: #{bigan_forward.1} parent=1 // pred_check
      _
    $region95: #{bigan_forward.1} parent=1 // pred_check_branch
      %195 = sbr.rel (0) target = $region97
    $region96: #{bigan_forward.1} parent=1 // pred_region
      %s197 = ssub.s32 2048, 2048
      %198 = vsyncadd [#allocation20], %s197
      %s199 = sshll.u32 [#allocation21], 4
      %s200 = int_to_ptr.vmem [resolvable:$true] %s199
      %205 = dma.hbm_to_vmem [thread:$0]  %s23, 2048, %s200, [#allocation20], 128, 128, 8
    $region97: #{bigan_forward.1} parent=1 // pred_fallthru
      _
    // Predicated region
    $region98: #{bigan_forward.1} parent=1 // pred_check
      _
    $region99: #{bigan_forward.1} parent=1 // pred_check_branch
      %207 = sbr.rel (0) target = $region101
    $region100: #{bigan_forward.1} parent=1 // pred_region
      %s209 = ssub.s32 16, 16
      %210 = vsyncadd [#allocation23], %s209
      %s212 = sshll.u32 [#allocation22], 4
      %s213 = int_to_ptr.vmem [resolvable:$true] %s212
      %215 = dma.hbm_to_vmem [thread:$0]  %s24, 16, %s213, [#allocation23]
    $region101: #{bigan_forward.1} parent=1 // pred_fallthru
      _
    // Predicated region
    $region102: #{bigan_forward.1} parent=1 // pred_check
      _
    $region103: #{bigan_forward.1} parent=1 // pred_check_branch
      %217 = sbr.rel (0) target = $region105
    $region104: #{bigan_forward.1} parent=1 // pred_region
      _
    $region105: #{bigan_forward.1} parent=1 // pred_fallthru
      _
    // Predicated region
    $region106: #{bigan_forward.1} parent=1 // pred_check
      _
    $region107: #{bigan_forward.1} parent=1 // pred_check_branch
      %219 = sbr.rel (0) target = $region109
    $region108: #{bigan_forward.1} parent=1 // pred_region
      %s221 = ssub.s32 16, 16
      %222 = vsyncadd [#allocation23], %s221
      %s224 = sshll.u32 [#allocation24], 4
      %s225 = int_to_ptr.vmem [resolvable:$true] %s224
      %227 = dma.hbm_to_vmem [thread:$0]  %s26, 16, %s225, [#allocation23]
    $region109: #{bigan_forward.1} parent=1 // pred_fallthru
      _
    // Predicated region
    $region110: #{bigan_forward.1} parent=1 // pred_check
      _
    $region111: #{bigan_forward.1} parent=1 // pred_check_branch
      %229 = sbr.rel (0) target = $region113
    $region112: #{bigan_forward.1} parent=1 // pred_region
      %230 = dma.done [#allocation3], 128
    $region113: #{bigan_forward.1} parent=1 // pred_fallthru
      _
    // Predicated region
    $region114: #{bigan_forward.1} parent=1 // pred_check
      _
    $region115: #{bigan_forward.1} parent=1 // pred_check_branch
      %232 = sbr.rel (0) target = $region117
    $region116: #{bigan_forward.1} parent=1 // pred_region
      %233 = dma.done [#allocation5], 128
    $region117: #{bigan_forward.1} parent=1 // pred_fallthru
      _
    // Predicated region
    $region118: #{bigan_forward.1} parent=1 // pred_check
      _
    $region119: #{bigan_forward.1} parent=1 // pred_check_branch
      %235 = sbr.rel (0) target = $region121
    $region120: #{bigan_forward.1} parent=1 // pred_region
      %236 = dma.done [#allocation5], 512
    $region121: #{bigan_forward.1} parent=1 // pred_fallthru
      _
    // Predicated region
    $region122: #{bigan_forward.1} parent=1 // pred_check
      _
    $region123: #{bigan_forward.1} parent=1 // pred_check_branch
      %238 = sbr.rel (0) target = $region125
    $region124: #{bigan_forward.1} parent=1 // pred_region
      %239 = dma.done [#allocation8], 1024
    $region125: #{bigan_forward.1} parent=1 // pred_fallthru
      _
    // Predicated region
    $region126: #{bigan_forward.1} parent=1 // pred_check
      _
    $region127: #{bigan_forward.1} parent=1 // pred_check_branch
      %241 = sbr.rel (0) target = $region129
    $region128: #{bigan_forward.1} parent=1 // pred_region
      %242 = dma.done [#allocation8], 16
    $region129: #{bigan_forward.1} parent=1 // pred_fallthru
      _
    // Predicated region
    $region130: #{bigan_forward.1} parent=1 // pred_check
      _
    $region131: #{bigan_forward.1} parent=1 // pred_check_branch
      %244 = sbr.rel (0) target = $region133
    $region132: #{bigan_forward.1} parent=1 // pred_region
      %245 = dma.done [#allocation11], 16
    $region133: #{bigan_forward.1} parent=1 // pred_fallthru
      _
    // Predicated region
    $region134: #{bigan_forward.1} parent=1 // pred_check
      _
    $region135: #{bigan_forward.1} parent=1 // pred_check_branch
      %247 = sbr.rel (0) target = $region137
    $region136: #{bigan_forward.1} parent=1 // pred_region
      %248 = dma.done [#allocation11], 16
    $region137: #{bigan_forward.1} parent=1 // pred_fallthru
      _
    // Predicated region
    $region138: #{bigan_forward.1} parent=1 // pred_check
      _
    $region139: #{bigan_forward.1} parent=1 // pred_check_branch
      %250 = sbr.rel (0) target = $region141
    $region140: #{bigan_forward.1} parent=1 // pred_region
      %251 = dma.done [#allocation14], 1024
    $region141: #{bigan_forward.1} parent=1 // pred_fallthru
      _
    // Predicated region
    $region142: #{bigan_forward.1} parent=1 // pred_check
      _
    $region143: #{bigan_forward.1} parent=1 // pred_check_branch
      %253 = sbr.rel (0) target = $region145
    $region144: #{bigan_forward.1} parent=1 // pred_region
      %254 = dma.done [#allocation14], 512
    $region145: #{bigan_forward.1} parent=1 // pred_fallthru
      _
    // Predicated region
    $region146: #{bigan_forward.1} parent=1 // pred_check
      _
    $region147: #{bigan_forward.1} parent=1 // pred_check_branch
      %256 = sbr.rel (0) target = $region149
    $region148: #{bigan_forward.1} parent=1 // pred_region
      %257 = dma.done [#allocation17], 16
    $region149: #{bigan_forward.1} parent=1 // pred_fallthru
      _
    // Predicated region
    $region150: #{bigan_forward.1} parent=1 // pred_check
      _
    $region151: #{bigan_forward.1} parent=1 // pred_check_branch
      %259 = sbr.rel (0) target = $region153
    $region152: #{bigan_forward.1} parent=1 // pred_region
      %260 = dma.done [#allocation17], 2048
    $region153: #{bigan_forward.1} parent=1 // pred_fallthru
      _
    // Predicated region
    $region154: #{bigan_forward.1} parent=1 // pred_check
      _
    $region155: #{bigan_forward.1} parent=1 // pred_check_branch
      %262 = sbr.rel (0) target = $region157
    $region156: #{bigan_forward.1} parent=1 // pred_region
      %263 = dma.done [#allocation20], 16
    $region157: #{bigan_forward.1} parent=1 // pred_fallthru
      _
    // Predicated region
    $region158: #{bigan_forward.1} parent=1 // pred_check
      _
    $region159: #{bigan_forward.1} parent=1 // pred_check_branch
      %265 = sbr.rel (0) target = $region161
    $region160: #{bigan_forward.1} parent=1 // pred_region
      %266 = dma.done [#allocation20], 2048
    $region161: #{bigan_forward.1} parent=1 // pred_fallthru
      _
    // Predicated region
    $region162: #{bigan_forward.1} parent=1 // pred_check
      _
    $region163: #{bigan_forward.1} parent=1 // pred_check_branch
      %268 = sbr.rel (0) target = $region165
    $region164: #{bigan_forward.1} parent=1 // pred_region
      %269 = dma.done [#allocation23], 16
    $region165: #{bigan_forward.1} parent=1 // pred_fallthru
      _
    // Predicated region
    $region166: #{bigan_forward.1} parent=1 // pred_check
      _
    $region167: #{bigan_forward.1} parent=1 // pred_check_branch
      %271 = sbr.rel (0) target = $region169
    $region168: #{bigan_forward.1} parent=1 // pred_region
      %272 = dma.done [#allocation23], 16
    $region169: #{bigan_forward.1} parent=1 // pred_fallthru
      _
    %v273 = vld [vmem:[#allocation2] sm:$0xff]
    %v274 = vld [vmem:[#allocation4] sm:$0xff]
    %v275 = vld [vmem:[#allocation6] sm:$0xff]
    %v276 = vld [vmem:[#allocation6 + $0x8] sm:$0xff]
    %v277 = vld [vmem:[#allocation6 + $0x10] sm:$0xff]
    %v278 = vld [vmem:[#allocation6 + $0x18] sm:$0xff]
    %v279 = vld [vmem:[%s3] sm:$0x1]
    %v281 = vlaneseq
    %v282 = vshrl.u32 %v281, 7
    %v283 = vsub.s32 0, %v282
    %v284 = vrot.slane %v279, %v283
    %vm286 = vcmask 261120
    %v288 = vsel %vm286, %v274, 0
    %290 = vmatprep.subr.mxu0 0.0
    %291 = vmatpush1.msra.mxu0 0.0
    %292 = vmatprep.subr.mxu0 0.0
    %293 = vmatpush1.msra.mxu0 0.0
    %294 = vmatprep.subr.mxu0 0.0
    %295 = vmatpush1.msra.mxu0 0.0
    %296 = vmatprep.subr.mxu0 0.0
    %297 = vmatpush1.msra.mxu0 0.0
    %298 = vmatprep.subr.mxu0 0.0
    %299 = vmatpush1.msra.mxu0 0.0
    %300 = vmatprep.subr.mxu0 0.0
    %301 = vmatpush1.msra.mxu0 0.0
    %302 = vmatprep.subr.mxu0 0.0
    %303 = vmatpush1.msra.mxu0 0.0
    %304 = vmatprep.subr.mxu0 0.0
    %305 = vmatpush1.msra.mxu0 0.0
    %306 = vmatprep.subr.mxu0 0.0
    %307 = vmatpush1.msra.mxu0 0.0
    %308 = vmatprep.subr.mxu0 0.0
    %309 = vmatpush1.msra.mxu0 0.0
    %310 = vmatprep.subr.mxu0 0.0
    %311 = vmatpush1.msra.mxu0 0.0
    %312 = vmatprep.subr.mxu0 0.0
    %313 = vmatpush1.msra.mxu0 0.0
    %314 = vmatprep.subr.mxu0 0.0
    %315 = vmatpush1.msra.mxu0 %v278
    %316 = vmatprep.subr.mxu0 0.0
    %317 = vmatpush1.msra.mxu0 %v277
    %318 = vmatprep.subr.mxu0 0.0
    %319 = vmatpush1.msra.mxu0 %v276
    %320 = vmatprep.subr.mxu0 0.0
    %321 = vmatpush1.msra.mxu0 %v275
    %322 = vmatprep.subr.mxu0 0.0
    %323 = vmatpush2.msra.mxu0 0.0
    %324 = vmatprep.subr.mxu0 0.0
    %325 = vmatpush2.msra.mxu0 0.0
    %326 = vmatprep.subr.mxu0 0.0
    %327 = vmatpush2.msra.mxu0 0.0
    %328 = vmatprep.subr.mxu0 0.0
    %329 = vmatpush2.msra.mxu0 0.0
    %330 = vmatprep.subr.mxu0 0.0
    %331 = vmatpush2.msra.mxu0 0.0
    %332 = vmatprep.subr.mxu0 0.0
    %333 = vmatpush2.msra.mxu0 0.0
    %334 = vmatprep.subr.mxu0 0.0
    %335 = vmatpush2.msra.mxu0 0.0
    %336 = vmatprep.subr.mxu0 0.0
    %337 = vmatpush2.msra.mxu0 0.0
    %338 = vmatprep.subr.mxu0 0.0
    %339 = vmatpush2.msra.mxu0 0.0
    %340 = vmatprep.subr.mxu0 0.0
    %341 = vmatpush2.msra.mxu0 0.0
    %342 = vmatprep.subr.mxu0 0.0
    %343 = vmatpush2.msra.mxu0 0.0
    %344 = vmatprep.subr.mxu0 0.0
    %345 = vmatpush2.msra.mxu0 0.0
    %346 = vmatprep.subr.mxu0 0.0
    %347 = vmatpush2.msra.mxu0 0.0
    %348 = vmatprep.subr.mxu0 0.0
    %349 = vmatpush2.msra.mxu0 0.0
    %350 = vmatprep.subr.mxu0 0.0
    %351 = vmatpush2.msra.mxu0 0.0
    %352 = vmatprep.subr.mxu0 0.0
    %353 = vmatpush2.msra.mxu0 0.0
    %354 = vmatprep.mubr.f32.mxu0 0.0
    %355 = vmatmul.mubr.f32.gmra.mxu0 %v288
    %v356 = vpop.f32.mrf.mxu0
    %v357 = vadd.f32 %v284, %v356
    %v358 = vpop.f32.mrf.mxu0
    %359 = vdwg.mxu0
    %v360 = vmax.f32 %v357, 0.0
    %v361 = vld [vmem:[%s4] sm:$0xff]
    %v362 = vld [vmem:[%s4 + $0x8] sm:$0xff]
    %v363 = vld [vmem:[%s4 + $0x10] sm:$0xff]
    %v364 = vld [vmem:[%s4 + $0x18] sm:$0xff]
    %v365 = vld [vmem:[%s4 + $0x20] sm:$0xff]
    %v366 = vld [vmem:[%s4 + $0x28] sm:$0xff]
    %v367 = vld [vmem:[%s4 + $0x30] sm:$0xff]
    %v368 = vld [vmem:[%s4 + $0x38] sm:$0xff]
    %v369 = vld [vmem:[%s4 + $0x40] sm:$0xff]
    %v370 = vld [vmem:[%s4 + $0x48] sm:$0xff]
    %v371 = vld [vmem:[%s4 + $0x50] sm:$0xff]
    %v372 = vld [vmem:[%s4 + $0x58] sm:$0xff]
    %v373 = vld [vmem:[%s4 + $0x60] sm:$0xff]
    %v374 = vld [vmem:[%s4 + $0x68] sm:$0xff]
    %v375 = vld [vmem:[%s4 + $0x70] sm:$0xff]
    %v376 = vld [vmem:[%s4 + $0x78] sm:$0xff]
    %v377 = vld [vmem:[%s5] sm:$0x1]
    %v379 = vlaneseq
    %v380 = vshrl.u32 %v379, 7
    %v381 = vsub.s32 0, %v380
    %v382 = vrot.slane %v377, %v381
    %384 = vmatprep.subr.mxu0 0.0
    %385 = vmatpush1.msra.mxu0 %v376
    %386 = vmatprep.subr.mxu0 0.0
    %387 = vmatpush1.msra.mxu0 %v375
    %388 = vmatprep.subr.mxu0 0.0
    %389 = vmatpush1.msra.mxu0 %v374
    %390 = vmatprep.subr.mxu0 0.0
    %391 = vmatpush1.msra.mxu0 %v373
    %392 = vmatprep.subr.mxu0 0.0
    %393 = vmatpush1.msra.mxu0 %v372
    %394 = vmatprep.subr.mxu0 0.0
    %395 = vmatpush1.msra.mxu0 %v371
    %396 = vmatprep.subr.mxu0 0.0
    %397 = vmatpush1.msra.mxu0 %v370
    %398 = vmatprep.subr.mxu0 0.0
    %399 = vmatpush1.msra.mxu0 %v369
    %400 = vmatprep.subr.mxu0 0.0
    %401 = vmatpush1.msra.mxu0 %v368
    %402 = vmatprep.subr.mxu0 0.0
    %403 = vmatpush1.msra.mxu0 %v367
    %404 = vmatprep.subr.mxu0 0.0
    %405 = vmatpush1.msra.mxu0 %v366
    %406 = vmatprep.subr.mxu0 0.0
    %407 = vmatpush1.msra.mxu0 %v365
    %408 = vmatprep.subr.mxu0 0.0
    %409 = vmatpush1.msra.mxu0 %v364
    %410 = vmatprep.subr.mxu0 0.0
    %411 = vmatpush1.msra.mxu0 %v363
    %412 = vmatprep.subr.mxu0 0.0
    %413 = vmatpush1.msra.mxu0 %v362
    %414 = vmatprep.subr.mxu0 0.0
    %415 = vmatpush1.msra.mxu0 %v361
    %416 = vmatprep.subr.mxu0 0.0
    %417 = vmatpush2.msra.mxu0 0.0
    %418 = vmatprep.subr.mxu0 0.0
    %419 = vmatpush2.msra.mxu0 0.0
    %420 = vmatprep.subr.mxu0 0.0
    %421 = vmatpush2.msra.mxu0 0.0
    %422 = vmatprep.subr.mxu0 0.0
    %423 = vmatpush2.msra.mxu0 0.0
    %424 = vmatprep.subr.mxu0 0.0
    %425 = vmatpush2.msra.mxu0 0.0
    %426 = vmatprep.subr.mxu0 0.0
    %427 = vmatpush2.msra.mxu0 0.0
    %428 = vmatprep.subr.mxu0 0.0
    %429 = vmatpush2.msra.mxu0 0.0
    %430 = vmatprep.subr.mxu0 0.0
    %431 = vmatpush2.msra.mxu0 0.0
    %432 = vmatprep.subr.mxu0 0.0
    %433 = vmatpush2.msra.mxu0 0.0
    %434 = vmatprep.subr.mxu0 0.0
    %435 = vmatpush2.msra.mxu0 0.0
    %436 = vmatprep.subr.mxu0 0.0
    %437 = vmatpush2.msra.mxu0 0.0
    %438 = vmatprep.subr.mxu0 0.0
    %439 = vmatpush2.msra.mxu0 0.0
    %440 = vmatprep.subr.mxu0 0.0
    %441 = vmatpush2.msra.mxu0 0.0
    %442 = vmatprep.subr.mxu0 0.0
    %443 = vmatpush2.msra.mxu0 0.0
    %444 = vmatprep.subr.mxu0 0.0
    %445 = vmatpush2.msra.mxu0 0.0
    %446 = vmatprep.subr.mxu0 0.0
    %447 = vmatpush2.msra.mxu0 0.0
    %448 = vmatprep.mubr.f32.mxu0 0.0
    %449 = vmatmul.mubr.f32.gmra.mxu0 %v360
    %v450 = vpop.f32.mrf.mxu0
    %v451 = vadd.f32 %v382, %v450
    %v452 = vpop.f32.mrf.mxu0
    %453 = vdwg.mxu0
    %v454 = vmax.f32 %v451, 0.0
    %v455 = vld [vmem:[%s6] sm:$0xff]
    %v456 = vld [vmem:[%s6 + $0x8] sm:$0xff]
    %v457 = vld [vmem:[%s6 + $0x10] sm:$0xff]
    %v458 = vld [vmem:[%s6 + $0x18] sm:$0xff]
    %v459 = vld [vmem:[%s6 + $0x20] sm:$0xff]
    %v460 = vld [vmem:[%s6 + $0x28] sm:$0xff]
    %v461 = vld [vmem:[%s6 + $0x30] sm:$0xff]
    %v462 = vld [vmem:[%s6 + $0x38] sm:$0xff]
    %v463 = vld [vmem:[%s6 + $0x40] sm:$0xff]
    %v464 = vld [vmem:[%s6 + $0x48] sm:$0xff]
    %v465 = vld [vmem:[%s6 + $0x50] sm:$0xff]
    %v466 = vld [vmem:[%s6 + $0x58] sm:$0xff]
    %v467 = vld [vmem:[%s6 + $0x60] sm:$0xff]
    %v468 = vld [vmem:[%s6 + $0x68] sm:$0xff]
    %v469 = vld [vmem:[%s6 + $0x70] sm:$0xff]
    %v470 = vld [vmem:[%s6 + $0x78] sm:$0xff]
    %v471 = vld [vmem:[%s7] sm:$0x1]
    %v473 = vlaneseq
    %v474 = vshrl.u32 %v473, 7
    %v475 = vsub.s32 0, %v474
    %v476 = vrot.slane %v471, %v475
    %478 = vmatprep.subr.mxu0 0.0
    %479 = vmatpush1.msra.mxu0 %v470
    %480 = vmatprep.subr.mxu0 0.0
    %481 = vmatpush1.msra.mxu0 %v469
    %482 = vmatprep.subr.mxu0 0.0
    %483 = vmatpush1.msra.mxu0 %v468
    %484 = vmatprep.subr.mxu0 0.0
    %485 = vmatpush1.msra.mxu0 %v467
    %486 = vmatprep.subr.mxu0 0.0
    %487 = vmatpush1.msra.mxu0 %v466
    %488 = vmatprep.subr.mxu0 0.0
    %489 = vmatpush1.msra.mxu0 %v465
    %490 = vmatprep.subr.mxu0 0.0
    %491 = vmatpush1.msra.mxu0 %v464
    %492 = vmatprep.subr.mxu0 0.0
    %493 = vmatpush1.msra.mxu0 %v463
    %494 = vmatprep.subr.mxu0 0.0
    %495 = vmatpush1.msra.mxu0 %v462
    %496 = vmatprep.subr.mxu0 0.0
    %497 = vmatpush1.msra.mxu0 %v461
    %498 = vmatprep.subr.mxu0 0.0
    %499 = vmatpush1.msra.mxu0 %v460
    %500 = vmatprep.subr.mxu0 0.0
    %501 = vmatpush1.msra.mxu0 %v459
    %502 = vmatprep.subr.mxu0 0.0
    %503 = vmatpush1.msra.mxu0 %v458
    %504 = vmatprep.subr.mxu0 0.0
    %505 = vmatpush1.msra.mxu0 %v457
    %506 = vmatprep.subr.mxu0 0.0
    %507 = vmatpush1.msra.mxu0 %v456
    %508 = vmatprep.subr.mxu0 0.0
    %509 = vmatpush1.msra.mxu0 %v455
    %510 = vmatprep.subr.mxu0 0.0
    %511 = vmatpush2.msra.mxu0 0.0
    %512 = vmatprep.subr.mxu0 0.0
    %513 = vmatpush2.msra.mxu0 0.0
    %514 = vmatprep.subr.mxu0 0.0
    %515 = vmatpush2.msra.mxu0 0.0
    %516 = vmatprep.subr.mxu0 0.0
    %517 = vmatpush2.msra.mxu0 0.0
    %518 = vmatprep.subr.mxu0 0.0
    %519 = vmatpush2.msra.mxu0 0.0
    %520 = vmatprep.subr.mxu0 0.0
    %521 = vmatpush2.msra.mxu0 0.0
    %522 = vmatprep.subr.mxu0 0.0
    %523 = vmatpush2.msra.mxu0 0.0
    %524 = vmatprep.subr.mxu0 0.0
    %525 = vmatpush2.msra.mxu0 0.0
    %526 = vmatprep.subr.mxu0 0.0
    %527 = vmatpush2.msra.mxu0 0.0
    %528 = vmatprep.subr.mxu0 0.0
    %529 = vmatpush2.msra.mxu0 0.0
    %530 = vmatprep.subr.mxu0 0.0
    %531 = vmatpush2.msra.mxu0 0.0
    %532 = vmatprep.subr.mxu0 0.0
    %533 = vmatpush2.msra.mxu0 0.0
    %534 = vmatprep.subr.mxu0 0.0
    %535 = vmatpush2.msra.mxu0 0.0
    %536 = vmatprep.subr.mxu0 0.0
    %537 = vmatpush2.msra.mxu0 0.0
    %538 = vmatprep.subr.mxu0 0.0
    %539 = vmatpush2.msra.mxu0 0.0
    %540 = vmatprep.subr.mxu0 0.0
    %541 = vmatpush2.msra.mxu0 0.0
    %542 = vmatprep.mubr.f32.mxu0 0.0
    %543 = vmatmul.mubr.f32.gmra.mxu0 %v454
    %v544 = vpop.f32.mrf.mxu0
    %v545 = vadd.f32 %v476, %v544
    %v546 = vpop.f32.mrf.mxu0
    %547 = vdwg.mxu0
    %v548 = vmax.f32 %v545, 0.0
    %v549 = vld [vmem:[%s8] sm:$0xff]
    %v550 = vld [vmem:[%s8 + $0x8] sm:$0xff]
    %v551 = vld [vmem:[%s8 + $0x10] sm:$0xff]
    %v552 = vld [vmem:[%s8 + $0x18] sm:$0xff]
    %v553 = vld [vmem:[%s8 + $0x20] sm:$0xff]
    %v554 = vld [vmem:[%s8 + $0x28] sm:$0xff]
    %v555 = vld [vmem:[%s8 + $0x30] sm:$0xff]
    %v556 = vld [vmem:[%s8 + $0x38] sm:$0xff]
    %v557 = vld [vmem:[%s8 + $0x40] sm:$0xff]
    %v558 = vld [vmem:[%s8 + $0x48] sm:$0xff]
    %v559 = vld [vmem:[%s8 + $0x50] sm:$0xff]
    %v560 = vld [vmem:[%s8 + $0x58] sm:$0xff]
    %v561 = vld [vmem:[%s8 + $0x60] sm:$0xff]
    %v562 = vld [vmem:[%s8 + $0x68] sm:$0xff]
    %v563 = vld [vmem:[%s8 + $0x70] sm:$0xff]
    %v564 = vld [vmem:[%s8 + $0x78] sm:$0xff]
    %v565 = vld [vmem:[%s9] sm:$0x1]
    %v567 = vlaneseq
    %v568 = vshrl.u32 %v567, 7
    %v569 = vsub.s32 0, %v568
    %v570 = vrot.slane %v565, %v569
    %572 = vmatprep.subr.mxu0 0.0
    %573 = vmatpush1.msra.mxu0 %v564
    %574 = vmatprep.subr.mxu0 0.0
    %575 = vmatpush1.msra.mxu0 %v563
    %576 = vmatprep.subr.mxu0 0.0
    %577 = vmatpush1.msra.mxu0 %v562
    %578 = vmatprep.subr.mxu0 0.0
    %579 = vmatpush1.msra.mxu0 %v561
    %580 = vmatprep.subr.mxu0 0.0
    %581 = vmatpush1.msra.mxu0 %v560
    %582 = vmatprep.subr.mxu0 0.0
    %583 = vmatpush1.msra.mxu0 %v559
    %584 = vmatprep.subr.mxu0 0.0
    %585 = vmatpush1.msra.mxu0 %v558
    %586 = vmatprep.subr.mxu0 0.0
    %587 = vmatpush1.msra.mxu0 %v557
    %588 = vmatprep.subr.mxu0 0.0
    %589 = vmatpush1.msra.mxu0 %v556
    %590 = vmatprep.subr.mxu0 0.0
    %591 = vmatpush1.msra.mxu0 %v555
    %592 = vmatprep.subr.mxu0 0.0
    %593 = vmatpush1.msra.mxu0 %v554
    %594 = vmatprep.subr.mxu0 0.0
    %595 = vmatpush1.msra.mxu0 %v553
    %596 = vmatprep.subr.mxu0 0.0
    %597 = vmatpush1.msra.mxu0 %v552
    %598 = vmatprep.subr.mxu0 0.0
    %599 = vmatpush1.msra.mxu0 %v551
    %600 = vmatprep.subr.mxu0 0.0
    %601 = vmatpush1.msra.mxu0 %v550
    %602 = vmatprep.subr.mxu0 0.0
    %603 = vmatpush1.msra.mxu0 %v549
    %604 = vmatprep.subr.mxu0 0.0
    %605 = vmatpush2.msra.mxu0 0.0
    %606 = vmatprep.subr.mxu0 0.0
    %607 = vmatpush2.msra.mxu0 0.0
    %608 = vmatprep.subr.mxu0 0.0
    %609 = vmatpush2.msra.mxu0 0.0
    %610 = vmatprep.subr.mxu0 0.0
    %611 = vmatpush2.msra.mxu0 0.0
    %612 = vmatprep.subr.mxu0 0.0
    %613 = vmatpush2.msra.mxu0 0.0
    %614 = vmatprep.subr.mxu0 0.0
    %615 = vmatpush2.msra.mxu0 0.0
    %616 = vmatprep.subr.mxu0 0.0
    %617 = vmatpush2.msra.mxu0 0.0
    %618 = vmatprep.subr.mxu0 0.0
    %619 = vmatpush2.msra.mxu0 0.0
    %620 = vmatprep.subr.mxu0 0.0
    %621 = vmatpush2.msra.mxu0 0.0
    %622 = vmatprep.subr.mxu0 0.0
    %623 = vmatpush2.msra.mxu0 0.0
    %624 = vmatprep.subr.mxu0 0.0
    %625 = vmatpush2.msra.mxu0 0.0
    %626 = vmatprep.subr.mxu0 0.0
    %627 = vmatpush2.msra.mxu0 0.0
    %628 = vmatprep.subr.mxu0 0.0
    %629 = vmatpush2.msra.mxu0 0.0
    %630 = vmatprep.subr.mxu0 0.0
    %631 = vmatpush2.msra.mxu0 0.0
    %632 = vmatprep.subr.mxu0 0.0
    %633 = vmatpush2.msra.mxu0 0.0
    %634 = vmatprep.subr.mxu0 0.0
    %635 = vmatpush2.msra.mxu0 0.0
    %636 = vmatprep.mubr.f32.mxu0 0.0
    %637 = vmatmul.mubr.f32.gmra.mxu0 %v548
    %v638 = vpop.f32.mrf.mxu0
    %v639 = vadd.f32 %v570, %v638
    %v640 = vpop.f32.mrf.mxu0
    %641 = vdwg.mxu0
    %v642 = vld [vmem:[#allocation7] sm:$0xff]
    %v643 = vld [vmem:[#allocation7 + $0x8] sm:$0xff]
    %v644 = vld [vmem:[#allocation7 + $0x10] sm:$0xff]
    %v645 = vld [vmem:[#allocation7 + $0x18] sm:$0xff]
    %v646 = vld [vmem:[#allocation7 + $0x20] sm:$0xff]
    %v647 = vld [vmem:[#allocation7 + $0x28] sm:$0xff]
    %v648 = vld [vmem:[#allocation7 + $0x30] sm:$0xff]
    %v649 = vld [vmem:[#allocation7 + $0x38] sm:$0xff]
    %v650 = vld [vmem:[#allocation9] sm:$0x1]
    %v652 = vlaneseq
    %v653 = vshrl.u32 %v652, 7
    %v654 = vsub.s32 0, %v653
    %v655 = vrot.slane %v650, %v654
    %vm657 = vcmask 523264
    %v659 = vsel %vm657, %v273, 0
    %661 = vmatprep.subr.mxu0 0.0
    %662 = vmatpush1.msra.mxu0 0.0
    %663 = vmatprep.subr.mxu0 0.0
    %664 = vmatpush1.msra.mxu0 0.0
    %665 = vmatprep.subr.mxu0 0.0
    %666 = vmatpush1.msra.mxu0 0.0
    %667 = vmatprep.subr.mxu0 0.0
    %668 = vmatpush1.msra.mxu0 0.0
    %669 = vmatprep.subr.mxu0 0.0
    %670 = vmatpush1.msra.mxu0 0.0
    %671 = vmatprep.subr.mxu0 0.0
    %672 = vmatpush1.msra.mxu0 0.0
    %673 = vmatprep.subr.mxu0 0.0
    %674 = vmatpush1.msra.mxu0 0.0
    %675 = vmatprep.subr.mxu0 0.0
    %676 = vmatpush1.msra.mxu0 0.0
    %677 = vmatprep.subr.mxu0 0.0
    %678 = vmatpush1.msra.mxu0 %v649
    %679 = vmatprep.subr.mxu0 0.0
    %680 = vmatpush1.msra.mxu0 %v648
    %681 = vmatprep.subr.mxu0 0.0
    %682 = vmatpush1.msra.mxu0 %v647
    %683 = vmatprep.subr.mxu0 0.0
    %684 = vmatpush1.msra.mxu0 %v646
    %685 = vmatprep.subr.mxu0 0.0
    %686 = vmatpush1.msra.mxu0 %v645
    %687 = vmatprep.subr.mxu0 0.0
    %688 = vmatpush1.msra.mxu0 %v644
    %689 = vmatprep.subr.mxu0 0.0
    %690 = vmatpush1.msra.mxu0 %v643
    %691 = vmatprep.subr.mxu0 0.0
    %692 = vmatpush1.msra.mxu0 %v642
    %693 = vmatprep.subr.mxu0 0.0
    %694 = vmatpush2.msra.mxu0 0.0
    %695 = vmatprep.subr.mxu0 0.0
    %696 = vmatpush2.msra.mxu0 0.0
    %697 = vmatprep.subr.mxu0 0.0
    %698 = vmatpush2.msra.mxu0 0.0
    %699 = vmatprep.subr.mxu0 0.0
    %700 = vmatpush2.msra.mxu0 0.0
    %701 = vmatprep.subr.mxu0 0.0
    %702 = vmatpush2.msra.mxu0 0.0
    %703 = vmatprep.subr.mxu0 0.0
    %704 = vmatpush2.msra.mxu0 0.0
    %705 = vmatprep.subr.mxu0 0.0
    %706 = vmatpush2.msra.mxu0 0.0
    %707 = vmatprep.subr.mxu0 0.0
    %708 = vmatpush2.msra.mxu0 0.0
    %709 = vmatprep.subr.mxu0 0.0
    %710 = vmatpush2.msra.mxu0 0.0
    %711 = vmatprep.subr.mxu0 0.0
    %712 = vmatpush2.msra.mxu0 0.0
    %713 = vmatprep.subr.mxu0 0.0
    %714 = vmatpush2.msra.mxu0 0.0
    %715 = vmatprep.subr.mxu0 0.0
    %716 = vmatpush2.msra.mxu0 0.0
    %717 = vmatprep.subr.mxu0 0.0
    %718 = vmatpush2.msra.mxu0 0.0
    %719 = vmatprep.subr.mxu0 0.0
    %720 = vmatpush2.msra.mxu0 0.0
    %721 = vmatprep.subr.mxu0 0.0
    %722 = vmatpush2.msra.mxu0 0.0
    %723 = vmatprep.subr.mxu0 0.0
    %724 = vmatpush2.msra.mxu0 0.0
    %725 = vmatprep.mubr.f32.mxu0 0.0
    %726 = vmatmul.mubr.f32.gmra.mxu0 %v659
    %v727 = vpop.f32.mrf.mxu0
    %v728 = vadd.f32 %v655, %v727
    %v729 = vpop.f32.mrf.mxu0
    %730 = vdwg.mxu0
    %v731 = vmax.f32 %v728, 0.0
    %v732 = vld [vmem:[%s12] sm:$0xff]
    %v733 = vld [vmem:[%s12 + $0x8] sm:$0xff]
    %v734 = vld [vmem:[%s12 + $0x10] sm:$0xff]
    %v735 = vld [vmem:[%s12 + $0x18] sm:$0xff]
    %v736 = vld [vmem:[%s12 + $0x20] sm:$0xff]
    %v737 = vld [vmem:[%s12 + $0x28] sm:$0xff]
    %v738 = vld [vmem:[%s12 + $0x30] sm:$0xff]
    %v739 = vld [vmem:[%s12 + $0x38] sm:$0xff]
    %v740 = vld [vmem:[%s12 + $0x40] sm:$0xff]
    %v741 = vld [vmem:[%s12 + $0x48] sm:$0xff]
    %v742 = vld [vmem:[%s12 + $0x50] sm:$0xff]
    %v743 = vld [vmem:[%s12 + $0x58] sm:$0xff]
    %v744 = vld [vmem:[%s12 + $0x60] sm:$0xff]
    %v745 = vld [vmem:[%s12 + $0x68] sm:$0xff]
    %v746 = vld [vmem:[%s12 + $0x70] sm:$0xff]
    %v747 = vld [vmem:[%s12 + $0x78] sm:$0xff]
    %v748 = vld [vmem:[#allocation10] sm:$0x1]
    %v750 = vlaneseq
    %v751 = vshrl.u32 %v750, 7
    %v752 = vsub.s32 0, %v751
    %v753 = vrot.slane %v748, %v752
    %755 = vmatprep.subr.mxu0 0.0
    %756 = vmatpush1.msra.mxu0 %v747
    %757 = vmatprep.subr.mxu0 0.0
    %758 = vmatpush1.msra.mxu0 %v746
    %759 = vmatprep.subr.mxu0 0.0
    %760 = vmatpush1.msra.mxu0 %v745
    %761 = vmatprep.subr.mxu0 0.0
    %762 = vmatpush1.msra.mxu0 %v744
    %763 = vmatprep.subr.mxu0 0.0
    %764 = vmatpush1.msra.mxu0 %v743
    %765 = vmatprep.subr.mxu0 0.0
    %766 = vmatpush1.msra.mxu0 %v742
    %767 = vmatprep.subr.mxu0 0.0
    %768 = vmatpush1.msra.mxu0 %v741
    %769 = vmatprep.subr.mxu0 0.0
    %770 = vmatpush1.msra.mxu0 %v740
    %771 = vmatprep.subr.mxu0 0.0
    %772 = vmatpush1.msra.mxu0 %v739
    %773 = vmatprep.subr.mxu0 0.0
    %774 = vmatpush1.msra.mxu0 %v738
    %775 = vmatprep.subr.mxu0 0.0
    %776 = vmatpush1.msra.mxu0 %v737
    %777 = vmatprep.subr.mxu0 0.0
    %778 = vmatpush1.msra.mxu0 %v736
    %779 = vmatprep.subr.mxu0 0.0
    %780 = vmatpush1.msra.mxu0 %v735
    %781 = vmatprep.subr.mxu0 0.0
    %782 = vmatpush1.msra.mxu0 %v734
    %783 = vmatprep.subr.mxu0 0.0
    %784 = vmatpush1.msra.mxu0 %v733
    %785 = vmatprep.subr.mxu0 0.0
    %786 = vmatpush1.msra.mxu0 %v732
    %787 = vmatprep.subr.mxu0 0.0
    %788 = vmatpush2.msra.mxu0 0.0
    %789 = vmatprep.subr.mxu0 0.0
    %790 = vmatpush2.msra.mxu0 0.0
    %791 = vmatprep.subr.mxu0 0.0
    %792 = vmatpush2.msra.mxu0 0.0
    %793 = vmatprep.subr.mxu0 0.0
    %794 = vmatpush2.msra.mxu0 0.0
    %795 = vmatprep.subr.mxu0 0.0
    %796 = vmatpush2.msra.mxu0 0.0
    %797 = vmatprep.subr.mxu0 0.0
    %798 = vmatpush2.msra.mxu0 0.0
    %799 = vmatprep.subr.mxu0 0.0
    %800 = vmatpush2.msra.mxu0 0.0
    %801 = vmatprep.subr.mxu0 0.0
    %802 = vmatpush2.msra.mxu0 0.0
    %803 = vmatprep.subr.mxu0 0.0
    %804 = vmatpush2.msra.mxu0 0.0
    %805 = vmatprep.subr.mxu0 0.0
    %806 = vmatpush2.msra.mxu0 0.0
    %807 = vmatprep.subr.mxu0 0.0
    %808 = vmatpush2.msra.mxu0 0.0
    %809 = vmatprep.subr.mxu0 0.0
    %810 = vmatpush2.msra.mxu0 0.0
    %811 = vmatprep.subr.mxu0 0.0
    %812 = vmatpush2.msra.mxu0 0.0
    %813 = vmatprep.subr.mxu0 0.0
    %814 = vmatpush2.msra.mxu0 0.0
    %815 = vmatprep.subr.mxu0 0.0
    %816 = vmatpush2.msra.mxu0 0.0
    %817 = vmatprep.subr.mxu0 0.0
    %818 = vmatpush2.msra.mxu0 0.0
    %819 = vmatprep.mubr.f32.mxu0 0.0
    %820 = vmatmul.mubr.f32.gmra.mxu0 %v731
    %v821 = vpop.f32.mrf.mxu0
    %v822 = vadd.f32 %v753, %v821
    %v823 = vpop.f32.mrf.mxu0
    %824 = vdwg.mxu0
    %v825 = vmax.f32 %v822, 0.0
    %v826 = vld [vmem:[%s14] sm:$0xff]
    %v827 = vld [vmem:[%s14 + $0x8] sm:$0xff]
    %v828 = vld [vmem:[%s14 + $0x10] sm:$0xff]
    %v829 = vld [vmem:[%s14 + $0x18] sm:$0xff]
    %v830 = vld [vmem:[%s14 + $0x20] sm:$0xff]
    %v831 = vld [vmem:[%s14 + $0x28] sm:$0xff]
    %v832 = vld [vmem:[%s14 + $0x30] sm:$0xff]
    %v833 = vld [vmem:[%s14 + $0x38] sm:$0xff]
    %v834 = vld [vmem:[%s14 + $0x40] sm:$0xff]
    %v835 = vld [vmem:[%s14 + $0x48] sm:$0xff]
    %v836 = vld [vmem:[%s14 + $0x50] sm:$0xff]
    %v837 = vld [vmem:[%s14 + $0x58] sm:$0xff]
    %v838 = vld [vmem:[%s14 + $0x60] sm:$0xff]
    %v839 = vld [vmem:[%s14 + $0x68] sm:$0xff]
    %v840 = vld [vmem:[%s14 + $0x70] sm:$0xff]
    %v841 = vld [vmem:[%s14 + $0x78] sm:$0xff]
    %v842 = vld [vmem:[#allocation12] sm:$0x1]
    %v844 = vlaneseq
    %v845 = vshrl.u32 %v844, 7
    %v846 = vsub.s32 0, %v845
    %v847 = vrot.slane %v842, %v846
    %849 = vmatprep.subr.mxu0 0.0
    %850 = vmatpush1.msra.mxu0 %v841
    %851 = vmatprep.subr.mxu0 0.0
    %852 = vmatpush1.msra.mxu0 %v840
    %853 = vmatprep.subr.mxu0 0.0
    %854 = vmatpush1.msra.mxu0 %v839
    %855 = vmatprep.subr.mxu0 0.0
    %856 = vmatpush1.msra.mxu0 %v838
    %857 = vmatprep.subr.mxu0 0.0
    %858 = vmatpush1.msra.mxu0 %v837
    %859 = vmatprep.subr.mxu0 0.0
    %860 = vmatpush1.msra.mxu0 %v836
    %861 = vmatprep.subr.mxu0 0.0
    %862 = vmatpush1.msra.mxu0 %v835
    %863 = vmatprep.subr.mxu0 0.0
    %864 = vmatpush1.msra.mxu0 %v834
    %865 = vmatprep.subr.mxu0 0.0
    %866 = vmatpush1.msra.mxu0 %v833
    %867 = vmatprep.subr.mxu0 0.0
    %868 = vmatpush1.msra.mxu0 %v832
    %869 = vmatprep.subr.mxu0 0.0
    %870 = vmatpush1.msra.mxu0 %v831
    %871 = vmatprep.subr.mxu0 0.0
    %872 = vmatpush1.msra.mxu0 %v830
    %873 = vmatprep.subr.mxu0 0.0
    %874 = vmatpush1.msra.mxu0 %v829
    %875 = vmatprep.subr.mxu0 0.0
    %876 = vmatpush1.msra.mxu0 %v828
    %877 = vmatprep.subr.mxu0 0.0
    %878 = vmatpush1.msra.mxu0 %v827
    %879 = vmatprep.subr.mxu0 0.0
    %880 = vmatpush1.msra.mxu0 %v826
    %881 = vmatprep.subr.mxu0 0.0
    %882 = vmatpush2.msra.mxu0 0.0
    %883 = vmatprep.subr.mxu0 0.0
    %884 = vmatpush2.msra.mxu0 0.0
    %885 = vmatprep.subr.mxu0 0.0
    %886 = vmatpush2.msra.mxu0 0.0
    %887 = vmatprep.subr.mxu0 0.0
    %888 = vmatpush2.msra.mxu0 0.0
    %889 = vmatprep.subr.mxu0 0.0
    %890 = vmatpush2.msra.mxu0 0.0
    %891 = vmatprep.subr.mxu0 0.0
    %892 = vmatpush2.msra.mxu0 0.0
    %893 = vmatprep.subr.mxu0 0.0
    %894 = vmatpush2.msra.mxu0 0.0
    %895 = vmatprep.subr.mxu0 0.0
    %896 = vmatpush2.msra.mxu0 0.0
    %897 = vmatprep.subr.mxu0 0.0
    %898 = vmatpush2.msra.mxu0 0.0
    %899 = vmatprep.subr.mxu0 0.0
    %900 = vmatpush2.msra.mxu0 0.0
    %901 = vmatprep.subr.mxu0 0.0
    %902 = vmatpush2.msra.mxu0 0.0
    %903 = vmatprep.subr.mxu0 0.0
    %904 = vmatpush2.msra.mxu0 0.0
    %905 = vmatprep.subr.mxu0 0.0
    %906 = vmatpush2.msra.mxu0 0.0
    %907 = vmatprep.subr.mxu0 0.0
    %908 = vmatpush2.msra.mxu0 0.0
    %909 = vmatprep.subr.mxu0 0.0
    %910 = vmatpush2.msra.mxu0 0.0
    %911 = vmatprep.subr.mxu0 0.0
    %912 = vmatpush2.msra.mxu0 0.0
    %913 = vmatprep.mubr.f32.mxu0 0.0
    %914 = vmatmul.mubr.f32.gmra.mxu0 %v825
    %v915 = vpop.f32.mrf.mxu0
    %v916 = vadd.f32 %v847, %v915
    %v917 = vpop.f32.mrf.mxu0
    %918 = vdwg.mxu0
    %v919 = vmax.f32 %v916, 0.0
    %v920 = vld [vmem:[%s16] sm:$0xff]
    %v921 = vld [vmem:[%s16 + $0x8] sm:$0xff]
    %v922 = vld [vmem:[%s16 + $0x10] sm:$0xff]
    %v923 = vld [vmem:[%s16 + $0x18] sm:$0xff]
    %v924 = vld [vmem:[%s16 + $0x20] sm:$0xff]
    %v925 = vld [vmem:[%s16 + $0x28] sm:$0xff]
    %v926 = vld [vmem:[%s16 + $0x30] sm:$0xff]
    %v927 = vld [vmem:[%s16 + $0x38] sm:$0xff]
    %v928 = vld [vmem:[%s16 + $0x40] sm:$0xff]
    %v929 = vld [vmem:[%s16 + $0x48] sm:$0xff]
    %v930 = vld [vmem:[%s16 + $0x50] sm:$0xff]
    %v931 = vld [vmem:[%s16 + $0x58] sm:$0xff]
    %v932 = vld [vmem:[%s16 + $0x60] sm:$0xff]
    %v933 = vld [vmem:[%s16 + $0x68] sm:$0xff]
    %v934 = vld [vmem:[%s16 + $0x70] sm:$0xff]
    %v935 = vld [vmem:[%s16 + $0x78] sm:$0xff]
    %v936 = vld [vmem:[%s17] sm:$0x1]
    %v938 = vlaneseq
    %v939 = vshrl.u32 %v938, 7
    %v940 = vsub.s32 0, %v939
    %v941 = vrot.slane %v936, %v940
    %943 = vmatprep.subr.mxu0 0.0
    %944 = vmatpush1.msra.mxu0 %v935
    %945 = vmatprep.subr.mxu0 0.0
    %946 = vmatpush1.msra.mxu0 %v934
    %947 = vmatprep.subr.mxu0 0.0
    %948 = vmatpush1.msra.mxu0 %v933
    %949 = vmatprep.subr.mxu0 0.0
    %950 = vmatpush1.msra.mxu0 %v932
    %951 = vmatprep.subr.mxu0 0.0
    %952 = vmatpush1.msra.mxu0 %v931
    %953 = vmatprep.subr.mxu0 0.0
    %954 = vmatpush1.msra.mxu0 %v930
    %955 = vmatprep.subr.mxu0 0.0
    %956 = vmatpush1.msra.mxu0 %v929
    %957 = vmatprep.subr.mxu0 0.0
    %958 = vmatpush1.msra.mxu0 %v928
    %959 = vmatprep.subr.mxu0 0.0
    %960 = vmatpush1.msra.mxu0 %v927
    %961 = vmatprep.subr.mxu0 0.0
    %962 = vmatpush1.msra.mxu0 %v926
    %963 = vmatprep.subr.mxu0 0.0
    %964 = vmatpush1.msra.mxu0 %v925
    %965 = vmatprep.subr.mxu0 0.0
    %966 = vmatpush1.msra.mxu0 %v924
    %967 = vmatprep.subr.mxu0 0.0
    %968 = vmatpush1.msra.mxu0 %v923
    %969 = vmatprep.subr.mxu0 0.0
    %970 = vmatpush1.msra.mxu0 %v922
    %971 = vmatprep.subr.mxu0 0.0
    %972 = vmatpush1.msra.mxu0 %v921
    %973 = vmatprep.subr.mxu0 0.0
    %974 = vmatpush1.msra.mxu0 %v920
    %975 = vmatprep.subr.mxu0 0.0
    %976 = vmatpush2.msra.mxu0 0.0
    %977 = vmatprep.subr.mxu0 0.0
    %978 = vmatpush2.msra.mxu0 0.0
    %979 = vmatprep.subr.mxu0 0.0
    %980 = vmatpush2.msra.mxu0 0.0
    %981 = vmatprep.subr.mxu0 0.0
    %982 = vmatpush2.msra.mxu0 0.0
    %983 = vmatprep.subr.mxu0 0.0
    %984 = vmatpush2.msra.mxu0 0.0
    %985 = vmatprep.subr.mxu0 0.0
    %986 = vmatpush2.msra.mxu0 0.0
    %987 = vmatprep.subr.mxu0 0.0
    %988 = vmatpush2.msra.mxu0 0.0
    %989 = vmatprep.subr.mxu0 0.0
    %990 = vmatpush2.msra.mxu0 0.0
    %991 = vmatprep.subr.mxu0 0.0
    %992 = vmatpush2.msra.mxu0 0.0
    %993 = vmatprep.subr.mxu0 0.0
    %994 = vmatpush2.msra.mxu0 0.0
    %995 = vmatprep.subr.mxu0 0.0
    %996 = vmatpush2.msra.mxu0 0.0
    %997 = vmatprep.subr.mxu0 0.0
    %998 = vmatpush2.msra.mxu0 0.0
    %999 = vmatprep.subr.mxu0 0.0
    %1000 = vmatpush2.msra.mxu0 0.0
    %1001 = vmatprep.subr.mxu0 0.0
    %1002 = vmatpush2.msra.mxu0 0.0
    %1003 = vmatprep.subr.mxu0 0.0
    %1004 = vmatpush2.msra.mxu0 0.0
    %1005 = vmatprep.subr.mxu0 0.0
    %1006 = vmatpush2.msra.mxu0 0.0
    %1007 = vmatprep.mubr.f32.mxu0 0.0
    %1008 = vmatmul.mubr.f32.gmra.mxu0 %v919
    %v1009 = vpop.f32.mrf.mxu0
    %v1010 = vadd.f32 %v941, %v1009
    %v1011 = vpop.f32.mrf.mxu0
    %1012 = vdwg.mxu0
    %v1013 = vld [vmem:[#allocation13] sm:$0xff]
    %v1014 = vld [vmem:[#allocation13 + $0x8] sm:$0xff]
    %v1015 = vld [vmem:[#allocation13 + $0x10] sm:$0xff]
    %v1016 = vld [vmem:[#allocation13 + $0x18] sm:$0xff]
    %v1017 = vld [vmem:[#allocation13 + $0x20] sm:$0xff]
    %v1018 = vld [vmem:[#allocation13 + $0x28] sm:$0xff]
    %v1019 = vld [vmem:[#allocation13 + $0x30] sm:$0xff]
    %v1020 = vld [vmem:[#allocation13 + $0x38] sm:$0xff]
    %v1021 = vld [vmem:[#allocation15] sm:$0xff]
    %v1022 = vld [vmem:[#allocation15 + $0x8] sm:$0xff]
    %v1023 = vld [vmem:[#allocation15 + $0x10] sm:$0xff]
    %v1024 = vld [vmem:[#allocation15 + $0x18] sm:$0xff]
    %v1026 = vsel %vm286, %v1010, 0
    %1028 = vmatprep.subr.mxu0 0.0
    %1029 = vmatpush1.msra.mxu0 0.0
    %1030 = vmatprep.subr.mxu0 0.0
    %1031 = vmatpush1.msra.mxu0 0.0
    %1032 = vmatprep.subr.mxu0 0.0
    %1033 = vmatpush1.msra.mxu0 0.0
    %1034 = vmatprep.subr.mxu0 0.0
    %1035 = vmatpush1.msra.mxu0 0.0
    %1036 = vmatprep.subr.mxu0 0.0
    %1037 = vmatpush1.msra.mxu0 0.0
    %1038 = vmatprep.subr.mxu0 0.0
    %1039 = vmatpush1.msra.mxu0 0.0
    %1040 = vmatprep.subr.mxu0 0.0
    %1041 = vmatpush1.msra.mxu0 0.0
    %1042 = vmatprep.subr.mxu0 0.0
    %1043 = vmatpush1.msra.mxu0 0.0
    %1044 = vmatprep.subr.mxu0 0.0
    %1045 = vmatpush1.msra.mxu0 0.0
    %1046 = vmatprep.subr.mxu0 0.0
    %1047 = vmatpush1.msra.mxu0 0.0
    %1048 = vmatprep.subr.mxu0 0.0
    %1049 = vmatpush1.msra.mxu0 0.0
    %1050 = vmatprep.subr.mxu0 0.0
    %1051 = vmatpush1.msra.mxu0 0.0
    %1052 = vmatprep.subr.mxu0 0.0
    %1053 = vmatpush1.msra.mxu0 %v1024
    %1054 = vmatprep.subr.mxu0 0.0
    %1055 = vmatpush1.msra.mxu0 %v1023
    %1056 = vmatprep.subr.mxu0 0.0
    %1057 = vmatpush1.msra.mxu0 %v1022
    %1058 = vmatprep.subr.mxu0 0.0
    %1059 = vmatpush1.msra.mxu0 %v1021
    %1060 = vmatprep.subr.mxu0 0.0
    %1061 = vmatpush2.msra.mxu0 0.0
    %1062 = vmatprep.subr.mxu0 0.0
    %1063 = vmatpush2.msra.mxu0 0.0
    %1064 = vmatprep.subr.mxu0 0.0
    %1065 = vmatpush2.msra.mxu0 0.0
    %1066 = vmatprep.subr.mxu0 0.0
    %1067 = vmatpush2.msra.mxu0 0.0
    %1068 = vmatprep.subr.mxu0 0.0
    %1069 = vmatpush2.msra.mxu0 0.0
    %1070 = vmatprep.subr.mxu0 0.0
    %1071 = vmatpush2.msra.mxu0 0.0
    %1072 = vmatprep.subr.mxu0 0.0
    %1073 = vmatpush2.msra.mxu0 0.0
    %1074 = vmatprep.subr.mxu0 0.0
    %1075 = vmatpush2.msra.mxu0 0.0
    %1076 = vmatprep.subr.mxu0 0.0
    %1077 = vmatpush2.msra.mxu0 0.0
    %1078 = vmatprep.subr.mxu0 0.0
    %1079 = vmatpush2.msra.mxu0 0.0
    %1080 = vmatprep.subr.mxu0 0.0
    %1081 = vmatpush2.msra.mxu0 0.0
    %1082 = vmatprep.subr.mxu0 0.0
    %1083 = vmatpush2.msra.mxu0 0.0
    %1084 = vmatprep.subr.mxu0 0.0
    %1085 = vmatpush2.msra.mxu0 0.0
    %1086 = vmatprep.subr.mxu0 0.0
    %1087 = vmatpush2.msra.mxu0 0.0
    %1088 = vmatprep.subr.mxu0 0.0
    %1089 = vmatpush2.msra.mxu0 0.0
    %1090 = vmatprep.subr.mxu0 0.0
    %1091 = vmatpush2.msra.mxu0 0.0
    %1092 = vmatprep.mubr.f32.mxu0 0.0
    %1093 = vmatmul.mubr.f32.gmra.mxu0 %v1026
    %v1094 = vpop.f32.mrf.mxu0
    %v1095 = vadd.f32 0.0, %v1094
    %v1096 = vpop.f32.mrf.mxu0
    %1097 = vmatprep.mubr.f32.mxu0 0.0
    %1098 = vmatmul.mubr.f32.gmra.mxu0 %v288
    %v1099 = vpop.f32.mrf.mxu0
    %v1100 = vadd.f32 0.0, %v1099
    %v1101 = vpop.f32.mrf.mxu0
    %1102 = vdwg.mxu0
    %v1104 = vsel %vm657, %v639, 0
    %1106 = vmatprep.subr.mxu0 0.0
    %1107 = vmatpush1.msra.mxu0 0.0
    %1108 = vmatprep.subr.mxu0 0.0
    %1109 = vmatpush1.msra.mxu0 0.0
    %1110 = vmatprep.subr.mxu0 0.0
    %1111 = vmatpush1.msra.mxu0 0.0
    %1112 = vmatprep.subr.mxu0 0.0
    %1113 = vmatpush1.msra.mxu0 0.0
    %1114 = vmatprep.subr.mxu0 0.0
    %1115 = vmatpush1.msra.mxu0 0.0
    %1116 = vmatprep.subr.mxu0 0.0
    %1117 = vmatpush1.msra.mxu0 0.0
    %1118 = vmatprep.subr.mxu0 0.0
    %1119 = vmatpush1.msra.mxu0 0.0
    %1120 = vmatprep.subr.mxu0 0.0
    %1121 = vmatpush1.msra.mxu0 0.0
    %1122 = vmatprep.subr.mxu0 0.0
    %1123 = vmatpush1.msra.mxu0 %v1020
    %1124 = vmatprep.subr.mxu0 0.0
    %1125 = vmatpush1.msra.mxu0 %v1019
    %1126 = vmatprep.subr.mxu0 0.0
    %1127 = vmatpush1.msra.mxu0 %v1018
    %1128 = vmatprep.subr.mxu0 0.0
    %1129 = vmatpush1.msra.mxu0 %v1017
    %1130 = vmatprep.subr.mxu0 0.0
    %1131 = vmatpush1.msra.mxu0 %v1016
    %1132 = vmatprep.subr.mxu0 0.0
    %1133 = vmatpush1.msra.mxu0 %v1015
    %1134 = vmatprep.subr.mxu0 0.0
    %1135 = vmatpush1.msra.mxu0 %v1014
    %1136 = vmatprep.subr.mxu0 0.0
    %1137 = vmatpush1.msra.mxu0 %v1013
    %1138 = vmatprep.subr.mxu0 0.0
    %1139 = vmatpush2.msra.mxu0 0.0
    %1140 = vmatprep.subr.mxu0 0.0
    %1141 = vmatpush2.msra.mxu0 0.0
    %1142 = vmatprep.subr.mxu0 0.0
    %1143 = vmatpush2.msra.mxu0 0.0
    %1144 = vmatprep.subr.mxu0 0.0
    %1145 = vmatpush2.msra.mxu0 0.0
    %1146 = vmatprep.subr.mxu0 0.0
    %1147 = vmatpush2.msra.mxu0 0.0
    %1148 = vmatprep.subr.mxu0 0.0
    %1149 = vmatpush2.msra.mxu0 0.0
    %1150 = vmatprep.subr.mxu0 0.0
    %1151 = vmatpush2.msra.mxu0 0.0
    %1152 = vmatprep.subr.mxu0 0.0
    %1153 = vmatpush2.msra.mxu0 0.0
    %1154 = vmatprep.subr.mxu0 0.0
    %1155 = vmatpush2.msra.mxu0 0.0
    %1156 = vmatprep.subr.mxu0 0.0
    %1157 = vmatpush2.msra.mxu0 0.0
    %1158 = vmatprep.subr.mxu0 0.0
    %1159 = vmatpush2.msra.mxu0 0.0
    %1160 = vmatprep.subr.mxu0 0.0
    %1161 = vmatpush2.msra.mxu0 0.0
    %1162 = vmatprep.subr.mxu0 0.0
    %1163 = vmatpush2.msra.mxu0 0.0
    %1164 = vmatprep.subr.mxu0 0.0
    %1165 = vmatpush2.msra.mxu0 0.0
    %1166 = vmatprep.subr.mxu0 0.0
    %1167 = vmatpush2.msra.mxu0 0.0
    %1168 = vmatprep.subr.mxu0 0.0
    %1169 = vmatpush2.msra.mxu0 0.0
    %1170 = vmatprep.mubr.f32.mxu0 0.0
    %1171 = vmatmul.mubr.f32.gmra.mxu0 %v659
    %v1172 = vpop.f32.mrf.mxu0
    %v1173 = vadd.f32 %v1095, %v1172
    %v1174 = vpop.f32.mrf.mxu0
    %1175 = vmatprep.mubr.f32.mxu0 0.0
    %1176 = vmatmul.mubr.f32.gmra.mxu0 %v1104
    %v1177 = vpop.f32.mrf.mxu0
    %v1178 = vadd.f32 %v1100, %v1177
    %v1179 = vpop.f32.mrf.mxu0
    %1180 = vdwg.mxu0
    %v1181 = vld [vmem:[#allocation16] sm:$0x1]
    %v1183 = vlaneseq
    %v1184 = vshrl.u32 %v1183, 7
    %v1185 = vsub.s32 0, %v1184
    %v1186 = vrot.slane %v1181, %v1185
    %v1188 = vadd.f32 %v1173, %v1186
    %v1189 = vadd.f32 %v1178, %v1186
    %v1190 = vmax.f32 %v1188, 0.0
    %v1191 = vmax.f32 %v1189, 0.0
    %v1192 = vld [vmem:[#allocation18] sm:$0xff]
    %v1193 = vld [vmem:[#allocation18 + $0x8] sm:$0xff]
    %v1194 = vld [vmem:[#allocation18 + $0x10] sm:$0xff]
    %v1195 = vld [vmem:[#allocation18 + $0x18] sm:$0xff]
    %v1196 = vld [vmem:[#allocation18 + $0x20] sm:$0xff]
    %v1197 = vld [vmem:[#allocation18 + $0x28] sm:$0xff]
    %v1198 = vld [vmem:[#allocation18 + $0x30] sm:$0xff]
    %v1199 = vld [vmem:[#allocation18 + $0x38] sm:$0xff]
    %v1200 = vld [vmem:[#allocation18 + $0x40] sm:$0xff]
    %v1201 = vld [vmem:[#allocation18 + $0x48] sm:$0xff]
    %v1202 = vld [vmem:[#allocation18 + $0x50] sm:$0xff]
    %v1203 = vld [vmem:[#allocation18 + $0x58] sm:$0xff]
    %v1204 = vld [vmem:[#allocation18 + $0x60] sm:$0xff]
    %v1205 = vld [vmem:[#allocation18 + $0x68] sm:$0xff]
    %v1206 = vld [vmem:[#allocation18 + $0x70] sm:$0xff]
    %v1207 = vld [vmem:[#allocation18 + $0x78] sm:$0xff]
    %v1208 = vld [vmem:[#allocation19] sm:$0x1]
    %v1210 = vlaneseq
    %v1211 = vshrl.u32 %v1210, 7
    %v1212 = vsub.s32 0, %v1211
    %v1213 = vrot.slane %v1208, %v1212
    %1215 = vmatprep.subr.mxu0 0.0
    %1216 = vmatpush1.msra.mxu0 %v1207
    %1217 = vmatprep.subr.mxu0 0.0
    %1218 = vmatpush1.msra.mxu0 %v1206
    %1219 = vmatprep.subr.mxu0 0.0
    %1220 = vmatpush1.msra.mxu0 %v1205
    %1221 = vmatprep.subr.mxu0 0.0
    %1222 = vmatpush1.msra.mxu0 %v1204
    %1223 = vmatprep.subr.mxu0 0.0
    %1224 = vmatpush1.msra.mxu0 %v1203
    %1225 = vmatprep.subr.mxu0 0.0
    %1226 = vmatpush1.msra.mxu0 %v1202
    %1227 = vmatprep.subr.mxu0 0.0
    %1228 = vmatpush1.msra.mxu0 %v1201
    %1229 = vmatprep.subr.mxu0 0.0
    %1230 = vmatpush1.msra.mxu0 %v1200
    %1231 = vmatprep.subr.mxu0 0.0
    %1232 = vmatpush1.msra.mxu0 %v1199
    %1233 = vmatprep.subr.mxu0 0.0
    %1234 = vmatpush1.msra.mxu0 %v1198
    %1235 = vmatprep.subr.mxu0 0.0
    %1236 = vmatpush1.msra.mxu0 %v1197
    %1237 = vmatprep.subr.mxu0 0.0
    %1238 = vmatpush1.msra.mxu0 %v1196
    %1239 = vmatprep.subr.mxu0 0.0
    %1240 = vmatpush1.msra.mxu0 %v1195
    %1241 = vmatprep.subr.mxu0 0.0
    %1242 = vmatpush1.msra.mxu0 %v1194
    %1243 = vmatprep.subr.mxu0 0.0
    %1244 = vmatpush1.msra.mxu0 %v1193
    %1245 = vmatprep.subr.mxu0 0.0
    %1246 = vmatpush1.msra.mxu0 %v1192
    %1247 = vmatprep.subr.mxu0 0.0
    %1248 = vmatpush2.msra.mxu0 0.0
    %1249 = vmatprep.subr.mxu0 0.0
    %1250 = vmatpush2.msra.mxu0 0.0
    %1251 = vmatprep.subr.mxu0 0.0
    %1252 = vmatpush2.msra.mxu0 0.0
    %1253 = vmatprep.subr.mxu0 0.0
    %1254 = vmatpush2.msra.mxu0 0.0
    %1255 = vmatprep.subr.mxu0 0.0
    %1256 = vmatpush2.msra.mxu0 0.0
    %1257 = vmatprep.subr.mxu0 0.0
    %1258 = vmatpush2.msra.mxu0 0.0
    %1259 = vmatprep.subr.mxu0 0.0
    %1260 = vmatpush2.msra.mxu0 0.0
    %1261 = vmatprep.subr.mxu0 0.0
    %1262 = vmatpush2.msra.mxu0 0.0
    %1263 = vmatprep.subr.mxu0 0.0
    %1264 = vmatpush2.msra.mxu0 0.0
    %1265 = vmatprep.subr.mxu0 0.0
    %1266 = vmatpush2.msra.mxu0 0.0
    %1267 = vmatprep.subr.mxu0 0.0
    %1268 = vmatpush2.msra.mxu0 0.0
    %1269 = vmatprep.subr.mxu0 0.0
    %1270 = vmatpush2.msra.mxu0 0.0
    %1271 = vmatprep.subr.mxu0 0.0
    %1272 = vmatpush2.msra.mxu0 0.0
    %1273 = vmatprep.subr.mxu0 0.0
    %1274 = vmatpush2.msra.mxu0 0.0
    %1275 = vmatprep.subr.mxu0 0.0
    %1276 = vmatpush2.msra.mxu0 0.0
    %1277 = vmatprep.subr.mxu0 0.0
    %1278 = vmatpush2.msra.mxu0 0.0
    %1279 = vmatprep.mubr.f32.mxu0 0.0
    %1280 = vmatmul.mubr.f32.gmra.mxu0 %v1190
    %v1281 = vpop.f32.mrf.mxu0
    %v1282 = vadd.f32 %v1213, %v1281
    %v1283 = vpop.f32.mrf.mxu0
    %1284 = vmatprep.mubr.f32.mxu0 0.0
    %1285 = vmatmul.mubr.f32.gmra.mxu0 %v1191
    %v1286 = vpop.f32.mrf.mxu0
    %v1287 = vadd.f32 %v1213, %v1286
    %v1288 = vpop.f32.mrf.mxu0
    %1289 = vdwg.mxu0
    %v1290 = vmax.f32 %v1282, 0.0
    %v1291 = vmax.f32 %v1287, 0.0
    %v1292 = vld [vmem:[#allocation21] sm:$0xff]
    %v1293 = vld [vmem:[#allocation21 + $0x8] sm:$0xff]
    %v1294 = vld [vmem:[#allocation21 + $0x10] sm:$0xff]
    %v1295 = vld [vmem:[#allocation21 + $0x18] sm:$0xff]
    %v1296 = vld [vmem:[#allocation21 + $0x20] sm:$0xff]
    %v1297 = vld [vmem:[#allocation21 + $0x28] sm:$0xff]
    %v1298 = vld [vmem:[#allocation21 + $0x30] sm:$0xff]
    %v1299 = vld [vmem:[#allocation21 + $0x38] sm:$0xff]
    %v1300 = vld [vmem:[#allocation21 + $0x40] sm:$0xff]
    %v1301 = vld [vmem:[#allocation21 + $0x48] sm:$0xff]
    %v1302 = vld [vmem:[#allocation21 + $0x50] sm:$0xff]
    %v1303 = vld [vmem:[#allocation21 + $0x58] sm:$0xff]
    %v1304 = vld [vmem:[#allocation21 + $0x60] sm:$0xff]
    %v1305 = vld [vmem:[#allocation21 + $0x68] sm:$0xff]
    %v1306 = vld [vmem:[#allocation21 + $0x70] sm:$0xff]
    %v1307 = vld [vmem:[#allocation21 + $0x78] sm:$0xff]
    %v1308 = vld [vmem:[#allocation22] sm:$0x1]
    %v1310 = vlaneseq
    %v1311 = vshrl.u32 %v1310, 7
    %v1312 = vsub.s32 0, %v1311
    %v1313 = vrot.slane %v1308, %v1312
    %1315 = vmatprep.subr.mxu0 0.0
    %1316 = vmatpush1.msra.mxu0 %v1307
    %1317 = vmatprep.subr.mxu0 0.0
    %1318 = vmatpush1.msra.mxu0 %v1306
    %1319 = vmatprep.subr.mxu0 0.0
    %1320 = vmatpush1.msra.mxu0 %v1305
    %1321 = vmatprep.subr.mxu0 0.0
    %1322 = vmatpush1.msra.mxu0 %v1304
    %1323 = vmatprep.subr.mxu0 0.0
    %1324 = vmatpush1.msra.mxu0 %v1303
    %1325 = vmatprep.subr.mxu0 0.0
    %1326 = vmatpush1.msra.mxu0 %v1302
    %1327 = vmatprep.subr.mxu0 0.0
    %1328 = vmatpush1.msra.mxu0 %v1301
    %1329 = vmatprep.subr.mxu0 0.0
    %1330 = vmatpush1.msra.mxu0 %v1300
    %1331 = vmatprep.subr.mxu0 0.0
    %1332 = vmatpush1.msra.mxu0 %v1299
    %1333 = vmatprep.subr.mxu0 0.0
    %1334 = vmatpush1.msra.mxu0 %v1298
    %1335 = vmatprep.subr.mxu0 0.0
    %1336 = vmatpush1.msra.mxu0 %v1297
    %1337 = vmatprep.subr.mxu0 0.0
    %1338 = vmatpush1.msra.mxu0 %v1296
    %1339 = vmatprep.subr.mxu0 0.0
    %1340 = vmatpush1.msra.mxu0 %v1295
    %1341 = vmatprep.subr.mxu0 0.0
    %1342 = vmatpush1.msra.mxu0 %v1294
    %1343 = vmatprep.subr.mxu0 0.0
    %1344 = vmatpush1.msra.mxu0 %v1293
    %1345 = vmatprep.subr.mxu0 0.0
    %1346 = vmatpush1.msra.mxu0 %v1292
    %1347 = vmatprep.subr.mxu0 0.0
    %1348 = vmatpush2.msra.mxu0 0.0
    %1349 = vmatprep.subr.mxu0 0.0
    %1350 = vmatpush2.msra.mxu0 0.0
    %1351 = vmatprep.subr.mxu0 0.0
    %1352 = vmatpush2.msra.mxu0 0.0
    %1353 = vmatprep.subr.mxu0 0.0
    %1354 = vmatpush2.msra.mxu0 0.0
    %1355 = vmatprep.subr.mxu0 0.0
    %1356 = vmatpush2.msra.mxu0 0.0
    %1357 = vmatprep.subr.mxu0 0.0
    %1358 = vmatpush2.msra.mxu0 0.0
    %1359 = vmatprep.subr.mxu0 0.0
    %1360 = vmatpush2.msra.mxu0 0.0
    %1361 = vmatprep.subr.mxu0 0.0
    %1362 = vmatpush2.msra.mxu0 0.0
    %1363 = vmatprep.subr.mxu0 0.0
    %1364 = vmatpush2.msra.mxu0 0.0
    %1365 = vmatprep.subr.mxu0 0.0
    %1366 = vmatpush2.msra.mxu0 0.0
    %1367 = vmatprep.subr.mxu0 0.0
    %1368 = vmatpush2.msra.mxu0 0.0
    %1369 = vmatprep.subr.mxu0 0.0
    %1370 = vmatpush2.msra.mxu0 0.0
    %1371 = vmatprep.subr.mxu0 0.0
    %1372 = vmatpush2.msra.mxu0 0.0
    %1373 = vmatprep.subr.mxu0 0.0
    %1374 = vmatpush2.msra.mxu0 0.0
    %1375 = vmatprep.subr.mxu0 0.0
    %1376 = vmatpush2.msra.mxu0 0.0
    %1377 = vmatprep.subr.mxu0 0.0
    %1378 = vmatpush2.msra.mxu0 0.0
    %1379 = vmatprep.mubr.f32.mxu0 0.0
    %1380 = vmatmul.mubr.f32.gmra.mxu0 %v1290
    %v1381 = vpop.f32.mrf.mxu0
    %v1382 = vadd.f32 %v1313, %v1381
    %v1383 = vpop.f32.mrf.mxu0
    %1384 = vmatprep.mubr.f32.mxu0 0.0
    %1385 = vmatmul.mubr.f32.gmra.mxu0 %v1291
    %v1386 = vpop.f32.mrf.mxu0
    %v1387 = vadd.f32 %v1313, %v1386
    %v1388 = vpop.f32.mrf.mxu0
    %1389 = vdwg.mxu0
    %v1390 = vmax.f32 %v1382, 0.0
    %v1391 = vmax.f32 %v1387, 0.0
    %v1392 = vld [vmem:[%s25] sm:$0xff]
    %v1393 = vld [vmem:[%s25 + $0x8] sm:$0xff]
    %v1394 = vld [vmem:[%s25 + $0x10] sm:$0xff]
    %v1395 = vld [vmem:[%s25 + $0x18] sm:$0xff]
    %v1396 = vld [vmem:[%s25 + $0x20] sm:$0xff]
    %v1397 = vld [vmem:[%s25 + $0x28] sm:$0xff]
    %v1398 = vld [vmem:[%s25 + $0x30] sm:$0xff]
    %v1399 = vld [vmem:[%s25 + $0x38] sm:$0xff]
    %v1400 = vld [vmem:[%s25 + $0x40] sm:$0xff]
    %v1401 = vld [vmem:[%s25 + $0x48] sm:$0xff]
    %v1402 = vld [vmem:[%s25 + $0x50] sm:$0xff]
    %v1403 = vld [vmem:[%s25 + $0x58] sm:$0xff]
    %v1404 = vld [vmem:[%s25 + $0x60] sm:$0xff]
    %v1405 = vld [vmem:[%s25 + $0x68] sm:$0xff]
    %v1406 = vld [vmem:[%s25 + $0x70] sm:$0xff]
    %v1407 = vld [vmem:[%s25 + $0x78] sm:$0xff]
    %v1408 = vld [vmem:[#allocation24] sm:$0x1]
    %v1410 = vlaneseq
    %v1411 = vshrl.u32 %v1410, 7
    %v1412 = vsub.s32 0, %v1411
    %v1413 = vrot.slane %v1408, %v1412
    %1415 = vmatprep.subr.mxu0 0.0
    %1416 = vmatpush1.msra.mxu0 %v1407
    %1417 = vmatprep.subr.mxu0 0.0
    %1418 = vmatpush1.msra.mxu0 %v1406
    %1419 = vmatprep.subr.mxu0 0.0
    %1420 = vmatpush1.msra.mxu0 %v1405
    %1421 = vmatprep.subr.mxu0 0.0
    %1422 = vmatpush1.msra.mxu0 %v1404
    %1423 = vmatprep.subr.mxu0 0.0
    %1424 = vmatpush1.msra.mxu0 %v1403
    %1425 = vmatprep.subr.mxu0 0.0
    %1426 = vmatpush1.msra.mxu0 %v1402
    %1427 = vmatprep.subr.mxu0 0.0
    %1428 = vmatpush1.msra.mxu0 %v1401
    %1429 = vmatprep.subr.mxu0 0.0
    %1430 = vmatpush1.msra.mxu0 %v1400
    %1431 = vmatprep.subr.mxu0 0.0
    %1432 = vmatpush1.msra.mxu0 %v1399
    %1433 = vmatprep.subr.mxu0 0.0
    %1434 = vmatpush1.msra.mxu0 %v1398
    %1435 = vmatprep.subr.mxu0 0.0
    %1436 = vmatpush1.msra.mxu0 %v1397
    %1437 = vmatprep.subr.mxu0 0.0
    %1438 = vmatpush1.msra.mxu0 %v1396
    %1439 = vmatprep.subr.mxu0 0.0
    %1440 = vmatpush1.msra.mxu0 %v1395
    %1441 = vmatprep.subr.mxu0 0.0
    %1442 = vmatpush1.msra.mxu0 %v1394
    %1443 = vmatprep.subr.mxu0 0.0
    %1444 = vmatpush1.msra.mxu0 %v1393
    %1445 = vmatprep.subr.mxu0 0.0
    %1446 = vmatpush1.msra.mxu0 %v1392
    %1447 = vmatprep.subr.mxu0 0.0
    %1448 = vmatpush2.msra.mxu0 0.0
    %1449 = vmatprep.subr.mxu0 0.0
    %1450 = vmatpush2.msra.mxu0 0.0
    %1451 = vmatprep.subr.mxu0 0.0
    %1452 = vmatpush2.msra.mxu0 0.0
    %1453 = vmatprep.subr.mxu0 0.0
    %1454 = vmatpush2.msra.mxu0 0.0
    %1455 = vmatprep.subr.mxu0 0.0
    %1456 = vmatpush2.msra.mxu0 0.0
    %1457 = vmatprep.subr.mxu0 0.0
    %1458 = vmatpush2.msra.mxu0 0.0
    %1459 = vmatprep.subr.mxu0 0.0
    %1460 = vmatpush2.msra.mxu0 0.0
    %1461 = vmatprep.subr.mxu0 0.0
    %1462 = vmatpush2.msra.mxu0 0.0
    %1463 = vmatprep.subr.mxu0 0.0
    %1464 = vmatpush2.msra.mxu0 0.0
    %1465 = vmatprep.subr.mxu0 0.0
    %1466 = vmatpush2.msra.mxu0 0.0
    %1467 = vmatprep.subr.mxu0 0.0
    %1468 = vmatpush2.msra.mxu0 0.0
    %1469 = vmatprep.subr.mxu0 0.0
    %1470 = vmatpush2.msra.mxu0 0.0
    %1471 = vmatprep.subr.mxu0 0.0
    %1472 = vmatpush2.msra.mxu0 0.0
    %1473 = vmatprep.subr.mxu0 0.0
    %1474 = vmatpush2.msra.mxu0 0.0
    %1475 = vmatprep.subr.mxu0 0.0
    %1476 = vmatpush2.msra.mxu0 0.0
    %1477 = vmatprep.subr.mxu0 0.0
    %1478 = vmatpush2.msra.mxu0 0.0
    %1479 = vmatprep.mubr.f32.mxu0 0.0
    %1480 = vmatmul.mubr.f32.gmra.mxu0 %v1390
    %v1481 = vpop.f32.mrf.mxu0
    %v1482 = vadd.f32 %v1413, %v1481
    %v1483 = vpop.f32.mrf.mxu0
    %1484 = vmatprep.mubr.f32.mxu0 0.0
    %1485 = vmatmul.mubr.f32.gmra.mxu0 %v1391
    %v1486 = vpop.f32.mrf.mxu0
    %v1487 = vadd.f32 %v1413, %v1486
    %v1488 = vpop.f32.mrf.mxu0
    %1489 = vdwg.mxu0
    %v1490 = vsub.f32 0.0, %v1482
    %v1491 = vsub.f32 0.0, %v1487
    %v1492 = vmul.f32 %v1490, 1.442695
    %v1493 = vpow.pop %v1492
    %v1494 = vmul.f32 %v1491, 1.442695
    %v1495 = vpow.pop %v1494
    %v1496 = vadd.f32 %v1493, 1.0
    %v1497 = vadd.f32 %v1495, 1.0
    %v1498 = vrcp.pop %v1496
    %v1499 = vmul.f32 1.0, %v1498
    %v1500 = vrcp.pop %v1497
    %v1501 = vmul.f32 1.0, %v1500
    %vm1502 = vcmask 64512
    %1503 = vst.msk [vmem:[%s27] sm:$0xff] %vm1502, %v1499
    %1504 = vst.msk [vmem:[%s28] sm:$0xff] %vm1502, %v1501
    // Predicated region
    $region170: #{bigan_forward.1} parent=1 // pred_check
      _
    $region171: #{bigan_forward.1} parent=1 // pred_check_branch
      %1506 = sbr.rel (0) target = $region173
    $region172: #{bigan_forward.1} parent=1 // pred_region
      _
    $region173: #{bigan_forward.1} parent=1 // pred_fallthru
      _
    // Predicated region
    $region174: #{bigan_forward.1} parent=1 // pred_check
      _
    $region175: #{bigan_forward.1} parent=1 // pred_check_branch
      %1508 = sbr.rel (0) target = $region177
    $region176: #{bigan_forward.1} parent=1 // pred_region
      _
    $region177: #{bigan_forward.1} parent=1 // pred_fallthru
      _
    // Predicated region
    $region178: #{bigan_forward.1} parent=1 // pred_check
      _
    $region179: #{bigan_forward.1} parent=1 // pred_check_branch
      %1510 = sbr.rel (0) target = $region181
    $region180: #{bigan_forward.1} parent=1 // pred_region
      _
    $region181: #{bigan_forward.1} parent=1 // pred_fallthru
      _
    // Predicated region
    $region182: #{bigan_forward.1} parent=1 // pred_check
      _
    $region183: #{bigan_forward.1} parent=1 // pred_check_branch
      %1512 = sbr.rel (0) target = $region185
    $region184: #{bigan_forward.1} parent=1 // pred_region
      _
    $region185: #{bigan_forward.1} parent=1 // pred_fallthru
      _
    %1513 = vsyncpa [#allocation3], 1
    %1514 = vsyncpa [#allocation5], 1
    %1515 = vsyncpa [#allocation8], 1
    %1516 = vsyncpa [#allocation11], 1
    %1517 = vsyncpa [#allocation14], 1
    %1518 = vsyncpa [#allocation17], 1
    %1519 = vsyncpa [#allocation20], 1
    %1520 = vsyncpa [#allocation23], 1

</llo_original>
